<compile_context>
chip_gen: v6e
topology: v6e:2x2x1
jax: 0.10.0
libtpu: 0.0.40
codegen_flags: <defaults>
</compile_context>

<pallas_src>
import functools

import jax
import jax.numpy as jnp
from jax import lax
from jax.experimental import pallas as pl
from jax.experimental.pallas import tpu as pltpu


# --------------------------- fused LSTM + fc kernel ---------------------------
def _fused_lstm_fc_kernel(*refs, num_layers, seq_len, batch_block, hidden):
    """Single fused kernel: all LSTM layers + final fc for one batch block.

    refs layout:
      inputs : x (T, Bc, D) f32 (time-major; bf16 cast is folded in-kernel),
               then per layer: w_ih_t (D_in, 4H) bf16, w_hh_t (H, 4H) bf16,
                               b (1, 4H) f32,
               then fc_w_t (H, O_pad) bf16, fc_b (1, O_pad) f32
      outputs: out (Bc, O_pad) f32
      scratch: gproj (T*Bc, 4H) f32, hseq (T*Bc, H) bf16
    Gate column order inside the 4H axis is [i, f, o, g].
    """
    T, Bc, H = seq_len, batch_block, hidden
    n_in = 1 + 3 * num_layers + 2
    x_ref = refs[0]
    layer_refs = [refs[1 + 3 * l: 4 + 3 * l] for l in range(num_layers)]
    fcw_ref = refs[1 + 3 * num_layers]
    fcb_ref = refs[2 + 3 * num_layers]
    out_ref = refs[n_in]
    gproj_scr = refs[n_in + 1]
    hseq_scr = refs[n_in + 2]

    # Hoisted full-width activation mask (JAX does not CSE broadcast/iota, so
    # keep it out of the per-step body).  Lanes [0, 3H) -> sigmoid, rest -> tanh.
    sig_mask = lax.broadcasted_iota(jnp.int32, (Bc, 4 * H), 1) < (3 * H)

    # Full unroll only while the trip count is small (avoid vreg spills).
    unroll = True if T <= 16 else min(4, T)

    def run_layer(seq_bf16, wih_ref, whh_ref, b_ref, store_seq):
        # Hoisted input projection: one big lane-dense MXU matmul for all
        # timesteps, with the (b_ih + b_hh) bias folded in.
        gproj_scr[...] = (
            jnp.dot(seq_bf16, wih_ref[...], preferred_element_type=jnp.float32)
            + b_ref[...])
        whh = whh_ref[...]                       # (H, 4H) bf16, loop-invariant

        def step(t, carry):
            h, c = carry                         # f32 (Bc, H)
            row = pl.multiple_of(t * Bc, Bc)     # sublane-aligned slice offset
            gates = gproj_scr[pl.ds(row, Bc), :] + jnp.dot(
                h.astype(jnp.bfloat16), whh, preferred_element_type=jnp.float32)
            # One full-width sigmoid + tanh + select (no sub-vreg slicing of
            # the pre-activation).  Gate order is [i | f | o | g].
            act = jnp.where(sig_mask, jax.nn.sigmoid(gates), jnp.tanh(gates))
            i_g = act[:, :H]
            f_g = act[:, H:2 * H]
            o_g = act[:, 2 * H:3 * H]
            g_g = act[:, 3 * H:]
            c_new = f_g * c + i_g * g_g
            h_new = o_g * jnp.tanh(c_new)
            if store_seq:                        # next layer needs the sequence
                hseq_scr[pl.ds(row, Bc), :] = h_new.astype(jnp.bfloat16)
            return h_new, c_new

        init = (jnp.zeros((Bc, H), jnp.float32),
                jnp.zeros((Bc, H), jnp.float32))  # h0 = c0 = 0, as in PyTorch
        h_last, _ = lax.fori_loop(0, T, step, init, unroll=unroll)
        return h_last

    # Layer 0 input: (T, Bc, D) f32 -> (T*Bc, D) bf16 (flatten/cast in-kernel,
    # no extra host-side HBM pass producing a separate bf16 copy).
    D = x_ref.shape[-1]
    seq = x_ref[...].reshape(T * Bc, D).astype(jnp.bfloat16)
    h_last = None
    for l in range(num_layers):
        wih_ref, whh_ref, b_ref = layer_refs[l]
        last = (l == num_layers - 1)
        h_last = run_layer(seq, wih_ref, whh_ref, b_ref, store_seq=not last)
        if not last:
            seq = hseq_scr[...]                  # (T*Bc, H) bf16, already cast

    # fc on the last timestep's hidden state of the last layer (lane-padded N).
    out_ref[...] = (
        jnp.dot(h_last.astype(jnp.bfloat16), fcw_ref[...],
                preferred_element_type=jnp.float32)
        + fcb_ref[...]).astype(out_ref.dtype)


# --------------------------------- wrapper ------------------------------------
def lstm_model_forward(params, x_btd, *, output_size):
    """x_btd: (B, T, D) batch-first f32, as in the PyTorch module."""
    B, T, D = x_btd.shape
    layers = params["layers"]
    num_layers = len(layers)
    H = layers[0]["w_hh_t"].shape[0]
    O_pad = params["fc_w_t"].shape[1]            # lane-padded multiple of 128

    # Time-major for the hoisted projection; flatten + bf16 cast happen inside
    # the kernel.  (Folding this transpose in as well only matters once T*B*D
    # reaches MBs — see review item on host-side input prep.)
    x_tbd = jnp.transpose(x_btd, (1, 0, 2)).astype(jnp.float32)

    # Batch-parallel grid for v7x megacore: split the batch over 2 grid steps
    # when each core still gets >= 8 rows (fills f32 sublanes).  On v5e/v6e the
    # grid just runs sequentially on the single TensorCore.
    nb = 2 if (B >= 16 and B % 16 == 0) else 1
    Bc = B // nb

    inputs = [x_tbd]
    in_specs = [pl.BlockSpec((T, Bc, D), lambda i: (0, i, 0))]
    for lp in layers:
        for name in ("w_ih_t", "w_hh_t", "b"):
            w = lp[name]
            inputs.append(w)
            in_specs.append(pl.BlockSpec(w.shape, lambda i: (0, 0)))
    for name in ("fc_w_t", "fc_b"):
        w = params[name]
        inputs.append(w)
        in_specs.append(pl.BlockSpec(w.shape, lambda i: (0, 0)))

    out_specs = pl.BlockSpec((Bc, O_pad), lambda i: (i, 0))

    scratch_shapes = [
        pltpu.VMEM((T * Bc, 4 * H), jnp.float32),   # hoisted gate projections
        pltpu.VMEM((T * Bc, H), jnp.bfloat16),      # inter-layer hidden sequence
    ]

    # Explicit scoped-VMEM budget (default scoped limit is well below physical;
    # clamp at 64 MiB so the same plan fits v7x's per-core VMEM).
    block_bytes = T * Bc * D * 4 + Bc * O_pad * 4          # x block + out block
    for a in inputs[1:]:
        block_bytes += a.size * a.dtype.itemsize           # weights / biases
    scratch_bytes = T * Bc * 4 * H * 4 + T * Bc * H * 2
    vmem_limit = int(min(64 * 2**20,
                         max(32 * 2**20, 2 * (2 * block_bytes + scratch_bytes))))

    kernel = functools.partial(
        _fused_lstm_fc_kernel,
        num_layers=num_layers, seq_len=T, batch_block=Bc, hidden=H)

    out_padded = pl.pallas_call(
        kernel,
        out_shape=jax.ShapeDtypeStruct((B, O_pad), jnp.float32),
        grid_spec=pltpu.PrefetchScalarGridSpec(
            num_scalar_prefetch=0,
            grid=(nb,),
            in_specs=in_specs,
            out_specs=out_specs,
            scratch_shapes=scratch_shapes),
        compiler_params=pltpu.CompilerParams(
            dimension_semantics=("parallel",),
            vmem_limit_bytes=vmem_limit),
    )(*inputs)
    return out_padded[:, :output_size]


# -------------------------- params (PyTorch layout) ---------------------------
def init_raw_params(key, input_size, hidden_size, num_layers, output_size):
    """PyTorch-layout parameters, U(-1/sqrt(H), 1/sqrt(H)), gate order i,f,g,o."""
    bound = 1.0 / float(hidden_size) ** 0.5
    layers = []
    for layer in range(num_layers):
        d_in = input_size if layer == 0 else hidden_size
        key, k1, k2, k3, k4 = jax.random.split(key, 5)
        layers.append(dict(
            w_ih=jax.random.uniform(k1, (4 * hidden_size, d_in),
                                    jnp.float32, -bound, bound),
            w_hh=jax.random.uniform(k2, (4 * hidden_size, hidden_size),
                                    jnp.float32, -bound, bound),
            b_ih=jax.random.uniform(k3, (4 * hidden_size,),
                                    jnp.float32, -bound, bound),
            b_hh=jax.random.uniform(k4, (4 * hidden_size,),
                                    jnp.float32, -bound, bound),
        ))
    key, k5, k6 = jax.random.split(key, 3)
    fc_w = jax.random.uniform(k5, (output_size, hidden_size),
                              jnp.float32, -bound, bound)
    fc_b = jax.random.uniform(k6, (output_size,), jnp.float32, -bound, bound)
    return dict(layers=layers, fc_w=fc_w, fc_b=fc_b)


def _reorder_gates_ifog(m):
    """Permute PyTorch gate-row order [i, f, g, o] -> kernel order [i, f, o, g]."""
    H = m.shape[0] // 4
    return jnp.concatenate([m[:2 * H], m[3 * H:], m[2 * H:3 * H]], axis=0)


def prepare_kernel_params(raw):
    """Pre-transpose / reorder / pad / cast weights for the fused kernel."""
    layers = []
    for lp in raw["layers"]:
        layers.append(dict(
            w_ih_t=_reorder_gates_ifog(lp["w_ih"]).T.astype(jnp.bfloat16),
            w_hh_t=_reorder_gates_ifog(lp["w_hh"]).T.astype(jnp.bfloat16),
            b=_reorder_gates_ifog(lp["b_ih"] + lp["b_hh"])[None, :]
                .astype(jnp.float32),
        ))
    O, H = raw["fc_w"].shape
    O_pad = ((O + 127) // 128) * 128          # lane-dense fc output block
    fc_w_t = jnp.zeros((H, O_pad), jnp.float32).at[:, :O].set(raw["fc_w"].T)
    fc_b = jnp.zeros((1, O_pad), jnp.float32).at[0, :O].set(raw["fc_b"])
    return dict(layers=layers,
                fc_w_t=fc_w_t.astype(jnp.bfloat16),
                fc_b=fc_b)


# ---------------------------- pure-JAX reference ------------------------------
def _reference_forward(raw, x_btd):
    x = jnp.transpose(x_btd, (1, 0, 2)).astype(jnp.float32)   # (T, B, D)
    for lp in raw["layers"]:
        w_ih, w_hh = lp["w_ih"], lp["w_hh"]
        b = lp["b_ih"] + lp["b_hh"]
        H = w_hh.shape[1]
        T, B, _ = x.shape
        h = jnp.zeros((B, H), jnp.float32)
        c = jnp.zeros((B, H), jnp.float32)
        outs = []
        for t in range(T):
            gates = x[t] @ w_ih.T + h @ w_hh.T + b
            i = jax.nn.sigmoid(gates[:, 0 * H:1 * H])
            f = jax.nn.sigmoid(gates[:, 1 * H:2 * H])
            g = jnp.tanh(gates[:, 2 * H:3 * H])
            o = jax.nn.sigmoid(gates[:, 3 * H:4 * H])
            c = f * c + i * g
            h = o * jnp.tanh(c)
            outs.append(h)
        x = jnp.stack(outs, axis=0)
    return x[-1] @ raw["fc_w"].T + raw["fc_b"]


if __name__ == "__main__":
    input_size, hidden_size, num_layers, output_size = 16, 32, 2, 4
    seq = 8

    key = jax.random.PRNGKey(0)
    pkey, xkey = jax.random.split(key)
    raw = init_raw_params(pkey, input_size, hidden_size, num_layers, output_size)
    kparams = prepare_kernel_params(raw)

    fwd = jax.jit(functools.partial(lstm_model_forward, output_size=output_size))

    # batch=8 exercises the single-core form (fills f32 sublanes);
    # batch=16 additionally exercises the batch-parallel grid (v7x megacore).
    for batch in (8, 16):
        x = jax.random.normal(jax.random.fold_in(xkey, batch),
                              (batch, seq, input_size), jnp.float32)
        out = jax.block_until_ready(fwd(kparams, x))
        ref = _reference_forward(raw, x)
        assert out.shape == (batch, output_size)
        # bf16 matmul operands / bf16 inter-layer hseq vs f32 reference.
        err = float(jnp.max(jnp.abs(out - ref)))
        assert jnp.allclose(out, ref, atol=5e-2, rtol=5e-2), err

    print("KERNEL_OK")
</pallas_src>

<mosaic_0001>
module attributes {stable_mosaic.version = 11 : i64} {
  func.func @_fused_lstm_fc_kernel(%arg0: i32, %arg1: memref<8x8x16xf32, #tpu.memory_space<vmem>>, %arg2: memref<16x128xbf16, #tpu.memory_space<vmem>>, %arg3: memref<32x128xbf16, #tpu.memory_space<vmem>>, %arg4: memref<1x128xf32, #tpu.memory_space<vmem>>, %arg5: memref<32x128xbf16, #tpu.memory_space<vmem>>, %arg6: memref<32x128xbf16, #tpu.memory_space<vmem>>, %arg7: memref<1x128xf32, #tpu.memory_space<vmem>>, %arg8: memref<32x128xbf16, #tpu.memory_space<vmem>>, %arg9: memref<1x128xf32, #tpu.memory_space<vmem>>, %arg10: memref<8x128xf32, #tpu.memory_space<vmem>>, %arg11: memref<64x128xf32, #tpu.memory_space<vmem>>, %arg12: memref<64x32xbf16, #tpu.memory_space<vmem>>) attributes {dimension_semantics = [#tpu.dimension_semantics<parallel>], iteration_bounds = array<i64: 1>, scalar_prefetch = 0 : i64, scratch_operands = 2 : i64, tpu.core_type = #tpu.core_type<tc>, window_params = [{transform_indices = @transform_0, window_bounds = array<i64: 8, 8, 16>}, {pipeline_mode = #tpu.pipeline_mode<synchronous>, transform_indices = @transform_1, window_bounds = array<i64: 16, 128>}, {pipeline_mode = #tpu.pipeline_mode<synchronous>, transform_indices = @transform_2, window_bounds = array<i64: 32, 128>}, {pipeline_mode = #tpu.pipeline_mode<synchronous>, transform_indices = @transform_3, window_bounds = array<i64: 1, 128>}, {pipeline_mode = #tpu.pipeline_mode<synchronous>, transform_indices = @transform_4, window_bounds = array<i64: 32, 128>}, {pipeline_mode = #tpu.pipeline_mode<synchronous>, transform_indices = @transform_5, window_bounds = array<i64: 32, 128>}, {pipeline_mode = #tpu.pipeline_mode<synchronous>, transform_indices = @transform_6, window_bounds = array<i64: 1, 128>}, {pipeline_mode = #tpu.pipeline_mode<synchronous>, transform_indices = @transform_7, window_bounds = array<i64: 32, 128>}, {pipeline_mode = #tpu.pipeline_mode<synchronous>, transform_indices = @transform_8, window_bounds = array<i64: 1, 128>}, {transform_indices = @transform_9, window_bounds = array<i64: 8, 128>}]} {
    %0 = tpu.iota {dimensions = array<i32: 1>} : vector<8x128xi32>
    %c96_i32 = arith.constant 96 : i32
    %1 = vector.broadcast %c96_i32 : i32 to vector<8x128xi32>
    %2 = arith.cmpi slt, %0, %1 : vector<8x128xi32>
    %c0 = arith.constant 0 : index
    %c0_0 = arith.constant 0 : index
    %c0_1 = arith.constant 0 : index
    %3 = vector.load %arg1[%c0, %c0_0, %c0_1] : memref<8x8x16xf32, #tpu.memory_space<vmem>>, vector<8x8x16xf32>
    %4 = vector.shape_cast %3 : vector<8x8x16xf32> to vector<64x16xf32>
    %5 = arith.truncf %4 : vector<64x16xf32> to vector<64x16xbf16>
    %c0_2 = arith.constant 0 : index
    %c0_3 = arith.constant 0 : index
    %6 = vector.load %arg2[%c0_2, %c0_3] : memref<16x128xbf16, #tpu.memory_space<vmem>>, vector<16x128xbf16>
    %cst = arith.constant dense<0.000000e+00> : vector<64x128xf32>
    %7 = tpu.matmul %5, %6, %cst {dimension_numbers = #tpu.dot_dimension_numbers<[1], [0], [0], [1], [0, 0, 1, 1], [], []>} : vector<64x16xbf16>, vector<16x128xbf16>, vector<64x128xf32> -> vector<64x128xf32>
    %c0_4 = arith.constant 0 : index
    %c0_5 = arith.constant 0 : index
    %8 = vector.load %arg4[%c0_4, %c0_5] : memref<1x128xf32, #tpu.memory_space<vmem>>, vector<1x128xf32>
    %9 = vector.broadcast %8 : vector<1x128xf32> to vector<64x128xf32>
    %10 = arith.addf %7, %9 : vector<64x128xf32>
    %c0_6 = arith.constant 0 : index
    %c0_7 = arith.constant 0 : index
    %11 = vector.load %arg11[%c0_6, %c0_7] : memref<64x128xf32, #tpu.memory_space<vmem>>, vector<64x128xf32>
    tpu.vector_store %arg11[%c0_6, %c0_7], %10 {strides = array<i32>} : memref<64x128xf32, #tpu.memory_space<vmem>>, vector<64x128xf32>,
    %c0_8 = arith.constant 0 : index
    %c0_9 = arith.constant 0 : index
    %12 = vector.load %arg3[%c0_8, %c0_9] : memref<32x128xbf16, #tpu.memory_space<vmem>>, vector<32x128xbf16>
    %cst_10 = arith.constant 0.000000e+00 : f32
    %13 = vector.broadcast %cst_10 : f32 to vector<8x32xf32>
    %cst_11 = arith.constant 0.000000e+00 : f32
    %14 = vector.broadcast %cst_11 : f32 to vector<8x32xf32>
    %c0_i32 = arith.constant 0 : i32
    %c8_i32 = arith.constant 8 : i32
    %15 = arith.muli %c0_i32, %c8_i32 : i32
    %16 = tpu.assume_multiple %15, 8 : i32
    %17 = arith.index_cast %16 : i32 to index
    %c0_12 = arith.constant 0 : index
    %18 = vector.load %arg11[%17, %c0_12] : memref<64x128xf32, #tpu.memory_space<vmem>>, vector<8x128xf32>
    %19 = arith.truncf %13 : vector<8x32xf32> to vector<8x32xbf16>
    %cst_13 = arith.constant dense<0.000000e+00> : vector<8x128xf32>
    %20 = tpu.matmul %19, %12, %cst_13 {dimension_numbers = #tpu.dot_dimension_numbers<[1], [0], [0], [1], [0, 0, 1, 1], [], []>} : vector<8x32xbf16>, vector<32x128xbf16>, vector<8x128xf32> -> vector<8x128xf32>
    %21 = arith.addf %18, %20 : vector<8x128xf32>
    %22 = arith.negf %21 : vector<8x128xf32>
    %23 = math.exp %22 : vector<8x128xf32>
    %cst_14 = arith.constant 1.000000e+00 : f32
    %24 = vector.broadcast %cst_14 : f32 to vector<8x128xf32>
    %25 = arith.addf %24, %23 : vector<8x128xf32>
    %26 = arith.divf %24, %25 : vector<8x128xf32>
    %27 = math.tanh %21 : vector<8x128xf32>
    %28 = arith.select %2, %26, %27 : vector<8x128xi1>, vector<8x128xf32>
    %29 = vector.extract_strided_slice %28 {offsets = [0, 0], sizes = [8, 32], strides = [1, 1]} : vector<8x128xf32> to vector<8x32xf32>
    %30 = vector.extract_strided_slice %28 {offsets = [0, 32], sizes = [8, 32], strides = [1, 1]} : vector<8x128xf32> to vector<8x32xf32>
    %31 = vector.extract_strided_slice %28 {offsets = [0, 64], sizes = [8, 32], strides = [1, 1]} : vector<8x128xf32> to vector<8x32xf32>
    %32 = vector.extract_strided_slice %28 {offsets = [0, 96], sizes = [8, 32], strides = [1, 1]} : vector<8x128xf32> to vector<8x32xf32>
    %33 = arith.mulf %30, %14 : vector<8x32xf32>
    %34 = arith.mulf %29, %32 : vector<8x32xf32>
    %35 = arith.addf %33, %34 : vector<8x32xf32>
    %36 = math.tanh %35 : vector<8x32xf32>
    %37 = arith.mulf %31, %36 : vector<8x32xf32>
    %38 = arith.truncf %37 : vector<8x32xf32> to vector<8x32xbf16>
    %39 = arith.index_cast %16 : i32 to index
    %c0_15 = arith.constant 0 : index
    %40 = vector.load %arg12[%39, %c0_15] : memref<64x32xbf16, #tpu.memory_space<vmem>>, vector<8x32xbf16>
    tpu.vector_store %arg12[%39, %c0_15], %38 {strides = array<i32>} : memref<64x32xbf16, #tpu.memory_space<vmem>>, vector<8x32xbf16>,
    %c1_i32 = arith.constant 1 : i32
    %c8_i32_16 = arith.constant 8 : i32
    %41 = arith.muli %c1_i32, %c8_i32_16 : i32
    %42 = tpu.assume_multiple %41, 8 : i32
    %43 = arith.index_cast %42 : i32 to index
    %c0_17 = arith.constant 0 : index
    %44 = vector.load %arg11[%43, %c0_17] : memref<64x128xf32, #tpu.memory_space<vmem>>, vector<8x128xf32>
    %45 = arith.truncf %37 : vector<8x32xf32> to vector<8x32xbf16>
    %cst_18 = arith.constant dense<0.000000e+00> : vector<8x128xf32>
    %46 = tpu.matmul %45, %12, %cst_18 {dimension_numbers = #tpu.dot_dimension_numbers<[1], [0], [0], [1], [0, 0, 1, 1], [], []>} : vector<8x32xbf16>, vector<32x128xbf16>, vector<8x128xf32> -> vector<8x128xf32>
    %47 = arith.addf %44, %46 : vector<8x128xf32>
    %48 = arith.negf %47 : vector<8x128xf32>
    %49 = math.exp %48 : vector<8x128xf32>
    %cst_19 = arith.constant 1.000000e+00 : f32
    %50 = vector.broadcast %cst_19 : f32 to vector<8x128xf32>
    %51 = arith.addf %50, %49 : vector<8x128xf32>
    %52 = arith.divf %50, %51 : vector<8x128xf32>
    %53 = math.tanh %47 : vector<8x128xf32>
    %54 = arith.select %2, %52, %53 : vector<8x128xi1>, vector<8x128xf32>
    %55 = vector.extract_strided_slice %54 {offsets = [0, 0], sizes = [8, 32], strides = [1, 1]} : vector<8x128xf32> to vector<8x32xf32>
    %56 = vector.extract_strided_slice %54 {offsets = [0, 32], sizes = [8, 32], strides = [1, 1]} : vector<8x128xf32> to vector<8x32xf32>
    %57 = vector.extract_strided_slice %54 {offsets = [0, 64], sizes = [8, 32], strides = [1, 1]} : vector<8x128xf32> to vector<8x32xf32>
    %58 = vector.extract_strided_slice %54 {offsets = [0, 96], sizes = [8, 32], strides = [1, 1]} : vector<8x128xf32> to vector<8x32xf32>
    %59 = arith.mulf %56, %35 : vector<8x32xf32>
    %60 = arith.mulf %55, %58 : vector<8x32xf32>
    %61 = arith.addf %59, %60 : vector<8x32xf32>
    %62 = math.tanh %61 : vector<8x32xf32>
    %63 = arith.mulf %57, %62 : vector<8x32xf32>
    %64 = arith.truncf %63 : vector<8x32xf32> to vector<8x32xbf16>
    %65 = arith.index_cast %42 : i32 to index
    %c0_20 = arith.constant 0 : index
    %66 = vector.load %arg12[%65, %c0_20] : memref<64x32xbf16, #tpu.memory_space<vmem>>, vector<8x32xbf16>
    tpu.vector_store %arg12[%65, %c0_20], %64 {strides = array<i32>} : memref<64x32xbf16, #tpu.memory_space<vmem>>, vector<8x32xbf16>,
    %c2_i32 = arith.constant 2 : i32
    %c8_i32_21 = arith.constant 8 : i32
    %67 = arith.muli %c2_i32, %c8_i32_21 : i32
    %68 = tpu.assume_multiple %67, 8 : i32
    %69 = arith.index_cast %68 : i32 to index
    %c0_22 = arith.constant 0 : index
    %70 = vector.load %arg11[%69, %c0_22] : memref<64x128xf32, #tpu.memory_space<vmem>>, vector<8x128xf32>
    %71 = arith.truncf %63 : vector<8x32xf32> to vector<8x32xbf16>
    %cst_23 = arith.constant dense<0.000000e+00> : vector<8x128xf32>
    %72 = tpu.matmul %71, %12, %cst_23 {dimension_numbers = #tpu.dot_dimension_numbers<[1], [0], [0], [1], [0, 0, 1, 1], [], []>} : vector<8x32xbf16>, vector<32x128xbf16>, vector<8x128xf32> -> vector<8x128xf32>
    %73 = arith.addf %70, %72 : vector<8x128xf32>
    %74 = arith.negf %73 : vector<8x128xf32>
    %75 = math.exp %74 : vector<8x128xf32>
    %cst_24 = arith.constant 1.000000e+00 : f32
    %76 = vector.broadcast %cst_24 : f32 to vector<8x128xf32>
    %77 = arith.addf %76, %75 : vector<8x128xf32>
    %78 = arith.divf %76, %77 : vector<8x128xf32>
    %79 = math.tanh %73 : vector<8x128xf32>
    %80 = arith.select %2, %78, %79 : vector<8x128xi1>, vector<8x128xf32>
    %81 = vector.extract_strided_slice %80 {offsets = [0, 0], sizes = [8, 32], strides = [1, 1]} : vector<8x128xf32> to vector<8x32xf32>
    %82 = vector.extract_strided_slice %80 {offsets = [0, 32], sizes = [8, 32], strides = [1, 1]} : vector<8x128xf32> to vector<8x32xf32>
    %83 = vector.extract_strided_slice %80 {offsets = [0, 64], sizes = [8, 32], strides = [1, 1]} : vector<8x128xf32> to vector<8x32xf32>
    %84 = vector.extract_strided_slice %80 {offsets = [0, 96], sizes = [8, 32], strides = [1, 1]} : vector<8x128xf32> to vector<8x32xf32>
    %85 = arith.mulf %82, %61 : vector<8x32xf32>
    %86 = arith.mulf %81, %84 : vector<8x32xf32>
    %87 = arith.addf %85, %86 : vector<8x32xf32>
    %88 = math.tanh %87 : vector<8x32xf32>
    %89 = arith.mulf %83, %88 : vector<8x32xf32>
    %90 = arith.truncf %89 : vector<8x32xf32> to vector<8x32xbf16>
    %91 = arith.index_cast %68 : i32 to index
    %c0_25 = arith.constant 0 : index
    %92 = vector.load %arg12[%91, %c0_25] : memref<64x32xbf16, #tpu.memory_space<vmem>>, vector<8x32xbf16>
    tpu.vector_store %arg12[%91, %c0_25], %90 {strides = array<i32>} : memref<64x32xbf16, #tpu.memory_space<vmem>>, vector<8x32xbf16>,
    %c3_i32 = arith.constant 3 : i32
    %c8_i32_26 = arith.constant 8 : i32
    %93 = arith.muli %c3_i32, %c8_i32_26 : i32
    %94 = tpu.assume_multiple %93, 8 : i32
    %95 = arith.index_cast %94 : i32 to index
    %c0_27 = arith.constant 0 : index
    %96 = vector.load %arg11[%95, %c0_27] : memref<64x128xf32, #tpu.memory_space<vmem>>, vector<8x128xf32>
    %97 = arith.truncf %89 : vector<8x32xf32> to vector<8x32xbf16>
    %cst_28 = arith.constant dense<0.000000e+00> : vector<8x128xf32>
    %98 = tpu.matmul %97, %12, %cst_28 {dimension_numbers = #tpu.dot_dimension_numbers<[1], [0], [0], [1], [0, 0, 1, 1], [], []>} : vector<8x32xbf16>, vector<32x128xbf16>, vector<8x128xf32> -> vector<8x128xf32>
    %99 = arith.addf %96, %98 : vector<8x128xf32>
    %100 = arith.negf %99 : vector<8x128xf32>
    %101 = math.exp %100 : vector<8x128xf32>
    %cst_29 = arith.constant 1.000000e+00 : f32
    %102 = vector.broadcast %cst_29 : f32 to vector<8x128xf32>
    %103 = arith.addf %102, %101 : vector<8x128xf32>
    %104 = arith.divf %102, %103 : vector<8x128xf32>
    %105 = math.tanh %99 : vector<8x128xf32>
    %106 = arith.select %2, %104, %105 : vector<8x128xi1>, vector<8x128xf32>
    %107 = vector.extract_strided_slice %106 {offsets = [0, 0], sizes = [8, 32], strides = [1, 1]} : vector<8x128xf32> to vector<8x32xf32>
    %108 = vector.extract_strided_slice %106 {offsets = [0, 32], sizes = [8, 32], strides = [1, 1]} : vector<8x128xf32> to vector<8x32xf32>
    %109 = vector.extract_strided_slice %106 {offsets = [0, 64], sizes = [8, 32], strides = [1, 1]} : vector<8x128xf32> to vector<8x32xf32>
    %110 = vector.extract_strided_slice %106 {offsets = [0, 96], sizes = [8, 32], strides = [1, 1]} : vector<8x128xf32> to vector<8x32xf32>
    %111 = arith.mulf %108, %87 : vector<8x32xf32>
    %112 = arith.mulf %107, %110 : vector<8x32xf32>
    %113 = arith.addf %111, %112 : vector<8x32xf32>
    %114 = math.tanh %113 : vector<8x32xf32>
    %115 = arith.mulf %109, %114 : vector<8x32xf32>
    %116 = arith.truncf %115 : vector<8x32xf32> to vector<8x32xbf16>
    %117 = arith.index_cast %94 : i32 to index
    %c0_30 = arith.constant 0 : index
    %118 = vector.load %arg12[%117, %c0_30] : memref<64x32xbf16, #tpu.memory_space<vmem>>, vector<8x32xbf16>
    tpu.vector_store %arg12[%117, %c0_30], %116 {strides = array<i32>} : memref<64x32xbf16, #tpu.memory_space<vmem>>, vector<8x32xbf16>,
    %c4_i32 = arith.constant 4 : i32
    %c8_i32_31 = arith.constant 8 : i32
    %119 = arith.muli %c4_i32, %c8_i32_31 : i32
    %120 = tpu.assume_multiple %119, 8 : i32
    %121 = arith.index_cast %120 : i32 to index
    %c0_32 = arith.constant 0 : index
    %122 = vector.load %arg11[%121, %c0_32] : memref<64x128xf32, #tpu.memory_space<vmem>>, vector<8x128xf32>
    %123 = arith.truncf %115 : vector<8x32xf32> to vector<8x32xbf16>
    %cst_33 = arith.constant dense<0.000000e+00> : vector<8x128xf32>
    %124 = tpu.matmul %123, %12, %cst_33 {dimension_numbers = #tpu.dot_dimension_numbers<[1], [0], [0], [1], [0, 0, 1, 1], [], []>} : vector<8x32xbf16>, vector<32x128xbf16>, vector<8x128xf32> -> vector<8x128xf32>
    %125 = arith.addf %122, %124 : vector<8x128xf32>
    %126 = arith.negf %125 : vector<8x128xf32>
    %127 = math.exp %126 : vector<8x128xf32>
    %cst_34 = arith.constant 1.000000e+00 : f32
    %128 = vector.broadcast %cst_34 : f32 to vector<8x128xf32>
    %129 = arith.addf %128, %127 : vector<8x128xf32>
    %130 = arith.divf %128, %129 : vector<8x128xf32>
    %131 = math.tanh %125 : vector<8x128xf32>
    %132 = arith.select %2, %130, %131 : vector<8x128xi1>, vector<8x128xf32>
    %133 = vector.extract_strided_slice %132 {offsets = [0, 0], sizes = [8, 32], strides = [1, 1]} : vector<8x128xf32> to vector<8x32xf32>
    %134 = vector.extract_strided_slice %132 {offsets = [0, 32], sizes = [8, 32], strides = [1, 1]} : vector<8x128xf32> to vector<8x32xf32>
    %135 = vector.extract_strided_slice %132 {offsets = [0, 64], sizes = [8, 32], strides = [1, 1]} : vector<8x128xf32> to vector<8x32xf32>
    %136 = vector.extract_strided_slice %132 {offsets = [0, 96], sizes = [8, 32], strides = [1, 1]} : vector<8x128xf32> to vector<8x32xf32>
    %137 = arith.mulf %134, %113 : vector<8x32xf32>
    %138 = arith.mulf %133, %136 : vector<8x32xf32>
    %139 = arith.addf %137, %138 : vector<8x32xf32>
    %140 = math.tanh %139 : vector<8x32xf32>
    %141 = arith.mulf %135, %140 : vector<8x32xf32>
    %142 = arith.truncf %141 : vector<8x32xf32> to vector<8x32xbf16>
    %143 = arith.index_cast %120 : i32 to index
    %c0_35 = arith.constant 0 : index
    %144 = vector.load %arg12[%143, %c0_35] : memref<64x32xbf16, #tpu.memory_space<vmem>>, vector<8x32xbf16>
    tpu.vector_store %arg12[%143, %c0_35], %142 {strides = array<i32>} : memref<64x32xbf16, #tpu.memory_space<vmem>>, vector<8x32xbf16>,
    %c5_i32 = arith.constant 5 : i32
    %c8_i32_36 = arith.constant 8 : i32
    %145 = arith.muli %c5_i32, %c8_i32_36 : i32
    %146 = tpu.assume_multiple %145, 8 : i32
    %147 = arith.index_cast %146 : i32 to index
    %c0_37 = arith.constant 0 : index
    %148 = vector.load %arg11[%147, %c0_37] : memref<64x128xf32, #tpu.memory_space<vmem>>, vector<8x128xf32>
    %149 = arith.truncf %141 : vector<8x32xf32> to vector<8x32xbf16>
    %cst_38 = arith.constant dense<0.000000e+00> : vector<8x128xf32>
    %150 = tpu.matmul %149, %12, %cst_38 {dimension_numbers = #tpu.dot_dimension_numbers<[1], [0], [0], [1], [0, 0, 1, 1], [], []>} : vector<8x32xbf16>, vector<32x128xbf16>, vector<8x128xf32> -> vector<8x128xf32>
    %151 = arith.addf %148, %150 : vector<8x128xf32>
    %152 = arith.negf %151 : vector<8x128xf32>
    %153 = math.exp %152 : vector<8x128xf32>
    %cst_39 = arith.constant 1.000000e+00 : f32
    %154 = vector.broadcast %cst_39 : f32 to vector<8x128xf32>
    %155 = arith.addf %154, %153 : vector<8x128xf32>
    %156 = arith.divf %154, %155 : vector<8x128xf32>
    %157 = math.tanh %151 : vector<8x128xf32>
    %158 = arith.select %2, %156, %157 : vector<8x128xi1>, vector<8x128xf32>
    %159 = vector.extract_strided_slice %158 {offsets = [0, 0], sizes = [8, 32], strides = [1, 1]} : vector<8x128xf32> to vector<8x32xf32>
    %160 = vector.extract_strided_slice %158 {offsets = [0, 32], sizes = [8, 32], strides = [1, 1]} : vector<8x128xf32> to vector<8x32xf32>
    %161 = vector.extract_strided_slice %158 {offsets = [0, 64], sizes = [8, 32], strides = [1, 1]} : vector<8x128xf32> to vector<8x32xf32>
    %162 = vector.extract_strided_slice %158 {offsets = [0, 96], sizes = [8, 32], strides = [1, 1]} : vector<8x128xf32> to vector<8x32xf32>
    %163 = arith.mulf %160, %139 : vector<8x32xf32>
    %164 = arith.mulf %159, %162 : vector<8x32xf32>
    %165 = arith.addf %163, %164 : vector<8x32xf32>
    %166 = math.tanh %165 : vector<8x32xf32>
    %167 = arith.mulf %161, %166 : vector<8x32xf32>
    %168 = arith.truncf %167 : vector<8x32xf32> to vector<8x32xbf16>
    %169 = arith.index_cast %146 : i32 to index
    %c0_40 = arith.constant 0 : index
    %170 = vector.load %arg12[%169, %c0_40] : memref<64x32xbf16, #tpu.memory_space<vmem>>, vector<8x32xbf16>
    tpu.vector_store %arg12[%169, %c0_40], %168 {strides = array<i32>} : memref<64x32xbf16, #tpu.memory_space<vmem>>, vector<8x32xbf16>,
    %c6_i32 = arith.constant 6 : i32
    %c8_i32_41 = arith.constant 8 : i32
    %171 = arith.muli %c6_i32, %c8_i32_41 : i32
    %172 = tpu.assume_multiple %171, 8 : i32
    %173 = arith.index_cast %172 : i32 to index
    %c0_42 = arith.constant 0 : index
    %174 = vector.load %arg11[%173, %c0_42] : memref<64x128xf32, #tpu.memory_space<vmem>>, vector<8x128xf32>
    %175 = arith.truncf %167 : vector<8x32xf32> to vector<8x32xbf16>
    %cst_43 = arith.constant dense<0.000000e+00> : vector<8x128xf32>
    %176 = tpu.matmul %175, %12, %cst_43 {dimension_numbers = #tpu.dot_dimension_numbers<[1], [0], [0], [1], [0, 0, 1, 1], [], []>} : vector<8x32xbf16>, vector<32x128xbf16>, vector<8x128xf32> -> vector<8x128xf32>
    %177 = arith.addf %174, %176 : vector<8x128xf32>
    %178 = arith.negf %177 : vector<8x128xf32>
    %179 = math.exp %178 : vector<8x128xf32>
    %cst_44 = arith.constant 1.000000e+00 : f32
    %180 = vector.broadcast %cst_44 : f32 to vector<8x128xf32>
    %181 = arith.addf %180, %179 : vector<8x128xf32>
    %182 = arith.divf %180, %181 : vector<8x128xf32>
    %183 = math.tanh %177 : vector<8x128xf32>
    %184 = arith.select %2, %182, %183 : vector<8x128xi1>, vector<8x128xf32>
    %185 = vector.extract_strided_slice %184 {offsets = [0, 0], sizes = [8, 32], strides = [1, 1]} : vector<8x128xf32> to vector<8x32xf32>
    %186 = vector.extract_strided_slice %184 {offsets = [0, 32], sizes = [8, 32], strides = [1, 1]} : vector<8x128xf32> to vector<8x32xf32>
    %187 = vector.extract_strided_slice %184 {offsets = [0, 64], sizes = [8, 32], strides = [1, 1]} : vector<8x128xf32> to vector<8x32xf32>
    %188 = vector.extract_strided_slice %184 {offsets = [0, 96], sizes = [8, 32], strides = [1, 1]} : vector<8x128xf32> to vector<8x32xf32>
    %189 = arith.mulf %186, %165 : vector<8x32xf32>
    %190 = arith.mulf %185, %188 : vector<8x32xf32>
    %191 = arith.addf %189, %190 : vector<8x32xf32>
    %192 = math.tanh %191 : vector<8x32xf32>
    %193 = arith.mulf %187, %192 : vector<8x32xf32>
    %194 = arith.truncf %193 : vector<8x32xf32> to vector<8x32xbf16>
    %195 = arith.index_cast %172 : i32 to index
    %c0_45 = arith.constant 0 : index
    %196 = vector.load %arg12[%195, %c0_45] : memref<64x32xbf16, #tpu.memory_space<vmem>>, vector<8x32xbf16>
    tpu.vector_store %arg12[%195, %c0_45], %194 {strides = array<i32>} : memref<64x32xbf16, #tpu.memory_space<vmem>>, vector<8x32xbf16>,
    %c7_i32 = arith.constant 7 : i32
    %c8_i32_46 = arith.constant 8 : i32
    %197 = arith.muli %c7_i32, %c8_i32_46 : i32
    %198 = tpu.assume_multiple %197, 8 : i32
    %199 = arith.index_cast %198 : i32 to index
    %c0_47 = arith.constant 0 : index
    %200 = vector.load %arg11[%199, %c0_47] : memref<64x128xf32, #tpu.memory_space<vmem>>, vector<8x128xf32>
    %201 = arith.truncf %193 : vector<8x32xf32> to vector<8x32xbf16>
    %cst_48 = arith.constant dense<0.000000e+00> : vector<8x128xf32>
    %202 = tpu.matmul %201, %12, %cst_48 {dimension_numbers = #tpu.dot_dimension_numbers<[1], [0], [0], [1], [0, 0, 1, 1], [], []>} : vector<8x32xbf16>, vector<32x128xbf16>, vector<8x128xf32> -> vector<8x128xf32>
    %203 = arith.addf %200, %202 : vector<8x128xf32>
    %204 = arith.negf %203 : vector<8x128xf32>
    %205 = math.exp %204 : vector<8x128xf32>
    %cst_49 = arith.constant 1.000000e+00 : f32
    %206 = vector.broadcast %cst_49 : f32 to vector<8x128xf32>
    %207 = arith.addf %206, %205 : vector<8x128xf32>
    %208 = arith.divf %206, %207 : vector<8x128xf32>
    %209 = math.tanh %203 : vector<8x128xf32>
    %210 = arith.select %2, %208, %209 : vector<8x128xi1>, vector<8x128xf32>
    %211 = vector.extract_strided_slice %210 {offsets = [0, 0], sizes = [8, 32], strides = [1, 1]} : vector<8x128xf32> to vector<8x32xf32>
    %212 = vector.extract_strided_slice %210 {offsets = [0, 32], sizes = [8, 32], strides = [1, 1]} : vector<8x128xf32> to vector<8x32xf32>
    %213 = vector.extract_strided_slice %210 {offsets = [0, 64], sizes = [8, 32], strides = [1, 1]} : vector<8x128xf32> to vector<8x32xf32>
    %214 = vector.extract_strided_slice %210 {offsets = [0, 96], sizes = [8, 32], strides = [1, 1]} : vector<8x128xf32> to vector<8x32xf32>
    %215 = arith.mulf %212, %191 : vector<8x32xf32>
    %216 = arith.mulf %211, %214 : vector<8x32xf32>
    %217 = arith.addf %215, %216 : vector<8x32xf32>
    %218 = math.tanh %217 : vector<8x32xf32>
    %219 = arith.mulf %213, %218 : vector<8x32xf32>
    %220 = arith.truncf %219 : vector<8x32xf32> to vector<8x32xbf16>
    %221 = arith.index_cast %198 : i32 to index
    %c0_50 = arith.constant 0 : index
    %222 = vector.load %arg12[%221, %c0_50] : memref<64x32xbf16, #tpu.memory_space<vmem>>, vector<8x32xbf16>
    tpu.vector_store %arg12[%221, %c0_50], %220 {strides = array<i32>} : memref<64x32xbf16, #tpu.memory_space<vmem>>, vector<8x32xbf16>,
    %c8_i32_51 = arith.constant 8 : i32
    %c0_52 = arith.constant 0 : index
    %c0_53 = arith.constant 0 : index
    %223 = vector.load %arg12[%c0_52, %c0_53] : memref<64x32xbf16, #tpu.memory_space<vmem>>, vector<64x32xbf16>
    %c0_54 = arith.constant 0 : index
    %c0_55 = arith.constant 0 : index
    %224 = vector.load %arg5[%c0_54, %c0_55] : memref<32x128xbf16, #tpu.memory_space<vmem>>, vector<32x128xbf16>
    %cst_56 = arith.constant dense<0.000000e+00> : vector<64x128xf32>
    %225 = tpu.matmul %223, %224, %cst_56 {dimension_numbers = #tpu.dot_dimension_numbers<[1], [0], [0], [1], [0, 0, 1, 1], [], []>} : vector<64x32xbf16>, vector<32x128xbf16>, vector<64x128xf32> -> vector<64x128xf32>
    %c0_57 = arith.constant 0 : index
    %c0_58 = arith.constant 0 : index
    %226 = vector.load %arg7[%c0_57, %c0_58] : memref<1x128xf32, #tpu.memory_space<vmem>>, vector<1x128xf32>
    %227 = vector.broadcast %226 : vector<1x128xf32> to vector<64x128xf32>
    %228 = arith.addf %225, %227 : vector<64x128xf32>
    %c0_59 = arith.constant 0 : index
    %c0_60 = arith.constant 0 : index
    %229 = vector.load %arg11[%c0_59, %c0_60] : memref<64x128xf32, #tpu.memory_space<vmem>>, vector<64x128xf32>
    tpu.vector_store %arg11[%c0_59, %c0_60], %228 {strides = array<i32>} : memref<64x128xf32, #tpu.memory_space<vmem>>, vector<64x128xf32>,
    %c0_61 = arith.constant 0 : index
    %c0_62 = arith.constant 0 : index
    %230 = vector.load %arg6[%c0_61, %c0_62] : memref<32x128xbf16, #tpu.memory_space<vmem>>, vector<32x128xbf16>
    %cst_63 = arith.constant 0.000000e+00 : f32
    %231 = vector.broadcast %cst_63 : f32 to vector<8x32xf32>
    %cst_64 = arith.constant 0.000000e+00 : f32
    %232 = vector.broadcast %cst_64 : f32 to vector<8x32xf32>
    %c0_i32_65 = arith.constant 0 : i32
    %c8_i32_66 = arith.constant 8 : i32
    %233 = arith.muli %c0_i32_65, %c8_i32_66 : i32
    %234 = tpu.assume_multiple %233, 8 : i32
    %235 = arith.index_cast %234 : i32 to index
    %c0_67 = arith.constant 0 : index
    %236 = vector.load %arg11[%235, %c0_67] : memref<64x128xf32, #tpu.memory_space<vmem>>, vector<8x128xf32>
    %237 = arith.truncf %231 : vector<8x32xf32> to vector<8x32xbf16>
    %cst_68 = arith.constant dense<0.000000e+00> : vector<8x128xf32>
    %238 = tpu.matmul %237, %230, %cst_68 {dimension_numbers = #tpu.dot_dimension_numbers<[1], [0], [0], [1], [0, 0, 1, 1], [], []>} : vector<8x32xbf16>, vector<32x128xbf16>, vector<8x128xf32> -> vector<8x128xf32>
    %239 = arith.addf %236, %238 : vector<8x128xf32>
    %240 = arith.negf %239 : vector<8x128xf32>
    %241 = math.exp %240 : vector<8x128xf32>
    %cst_69 = arith.constant 1.000000e+00 : f32
    %242 = vector.broadcast %cst_69 : f32 to vector<8x128xf32>
    %243 = arith.addf %242, %241 : vector<8x128xf32>
    %244 = arith.divf %242, %243 : vector<8x128xf32>
    %245 = math.tanh %239 : vector<8x128xf32>
    %246 = arith.select %2, %244, %245 : vector<8x128xi1>, vector<8x128xf32>
    %247 = vector.extract_strided_slice %246 {offsets = [0, 0], sizes = [8, 32], strides = [1, 1]} : vector<8x128xf32> to vector<8x32xf32>
    %248 = vector.extract_strided_slice %246 {offsets = [0, 32], sizes = [8, 32], strides = [1, 1]} : vector<8x128xf32> to vector<8x32xf32>
    %249 = vector.extract_strided_slice %246 {offsets = [0, 64], sizes = [8, 32], strides = [1, 1]} : vector<8x128xf32> to vector<8x32xf32>
    %250 = vector.extract_strided_slice %246 {offsets = [0, 96], sizes = [8, 32], strides = [1, 1]} : vector<8x128xf32> to vector<8x32xf32>
    %251 = arith.mulf %248, %232 : vector<8x32xf32>
    %252 = arith.mulf %247, %250 : vector<8x32xf32>
    %253 = arith.addf %251, %252 : vector<8x32xf32>
    %254 = math.tanh %253 : vector<8x32xf32>
    %255 = arith.mulf %249, %254 : vector<8x32xf32>
    %c1_i32_70 = arith.constant 1 : i32
    %c8_i32_71 = arith.constant 8 : i32
    %256 = arith.muli %c1_i32_70, %c8_i32_71 : i32
    %257 = tpu.assume_multiple %256, 8 : i32
    %258 = arith.index_cast %257 : i32 to index
    %c0_72 = arith.constant 0 : index
    %259 = vector.load %arg11[%258, %c0_72] : memref<64x128xf32, #tpu.memory_space<vmem>>, vector<8x128xf32>
    %260 = arith.truncf %255 : vector<8x32xf32> to vector<8x32xbf16>
    %cst_73 = arith.constant dense<0.000000e+00> : vector<8x128xf32>
    %261 = tpu.matmul %260, %230, %cst_73 {dimension_numbers = #tpu.dot_dimension_numbers<[1], [0], [0], [1], [0, 0, 1, 1], [], []>} : vector<8x32xbf16>, vector<32x128xbf16>, vector<8x128xf32> -> vector<8x128xf32>
    %262 = arith.addf %259, %261 : vector<8x128xf32>
    %263 = arith.negf %262 : vector<8x128xf32>
    %264 = math.exp %263 : vector<8x128xf32>
    %cst_74 = arith.constant 1.000000e+00 : f32
    %265 = vector.broadcast %cst_74 : f32 to vector<8x128xf32>
    %266 = arith.addf %265, %264 : vector<8x128xf32>
    %267 = arith.divf %265, %266 : vector<8x128xf32>
    %268 = math.tanh %262 : vector<8x128xf32>
    %269 = arith.select %2, %267, %268 : vector<8x128xi1>, vector<8x128xf32>
    %270 = vector.extract_strided_slice %269 {offsets = [0, 0], sizes = [8, 32], strides = [1, 1]} : vector<8x128xf32> to vector<8x32xf32>
    %271 = vector.extract_strided_slice %269 {offsets = [0, 32], sizes = [8, 32], strides = [1, 1]} : vector<8x128xf32> to vector<8x32xf32>
    %272 = vector.extract_strided_slice %269 {offsets = [0, 64], sizes = [8, 32], strides = [1, 1]} : vector<8x128xf32> to vector<8x32xf32>
    %273 = vector.extract_strided_slice %269 {offsets = [0, 96], sizes = [8, 32], strides = [1, 1]} : vector<8x128xf32> to vector<8x32xf32>
    %274 = arith.mulf %271, %253 : vector<8x32xf32>
    %275 = arith.mulf %270, %273 : vector<8x32xf32>
    %276 = arith.addf %274, %275 : vector<8x32xf32>
    %277 = math.tanh %276 : vector<8x32xf32>
    %278 = arith.mulf %272, %277 : vector<8x32xf32>
    %c2_i32_75 = arith.constant 2 : i32
    %c8_i32_76 = arith.constant 8 : i32
    %279 = arith.muli %c2_i32_75, %c8_i32_76 : i32
    %280 = tpu.assume_multiple %279, 8 : i32
    %281 = arith.index_cast %280 : i32 to index
    %c0_77 = arith.constant 0 : index
    %282 = vector.load %arg11[%281, %c0_77] : memref<64x128xf32, #tpu.memory_space<vmem>>, vector<8x128xf32>
    %283 = arith.truncf %278 : vector<8x32xf32> to vector<8x32xbf16>
    %cst_78 = arith.constant dense<0.000000e+00> : vector<8x128xf32>
    %284 = tpu.matmul %283, %230, %cst_78 {dimension_numbers = #tpu.dot_dimension_numbers<[1], [0], [0], [1], [0, 0, 1, 1], [], []>} : vector<8x32xbf16>, vector<32x128xbf16>, vector<8x128xf32> -> vector<8x128xf32>
    %285 = arith.addf %282, %284 : vector<8x128xf32>
    %286 = arith.negf %285 : vector<8x128xf32>
    %287 = math.exp %286 : vector<8x128xf32>
    %cst_79 = arith.constant 1.000000e+00 : f32
    %288 = vector.broadcast %cst_79 : f32 to vector<8x128xf32>
    %289 = arith.addf %288, %287 : vector<8x128xf32>
    %290 = arith.divf %288, %289 : vector<8x128xf32>
    %291 = math.tanh %285 : vector<8x128xf32>
    %292 = arith.select %2, %290, %291 : vector<8x128xi1>, vector<8x128xf32>
    %293 = vector.extract_strided_slice %292 {offsets = [0, 0], sizes = [8, 32], strides = [1, 1]} : vector<8x128xf32> to vector<8x32xf32>
    %294 = vector.extract_strided_slice %292 {offsets = [0, 32], sizes = [8, 32], strides = [1, 1]} : vector<8x128xf32> to vector<8x32xf32>
    %295 = vector.extract_strided_slice %292 {offsets = [0, 64], sizes = [8, 32], strides = [1, 1]} : vector<8x128xf32> to vector<8x32xf32>
    %296 = vector.extract_strided_slice %292 {offsets = [0, 96], sizes = [8, 32], strides = [1, 1]} : vector<8x128xf32> to vector<8x32xf32>
    %297 = arith.mulf %294, %276 : vector<8x32xf32>
    %298 = arith.mulf %293, %296 : vector<8x32xf32>
    %299 = arith.addf %297, %298 : vector<8x32xf32>
    %300 = math.tanh %299 : vector<8x32xf32>
    %301 = arith.mulf %295, %300 : vector<8x32xf32>
    %c3_i32_80 = arith.constant 3 : i32
    %c8_i32_81 = arith.constant 8 : i32
    %302 = arith.muli %c3_i32_80, %c8_i32_81 : i32
    %303 = tpu.assume_multiple %302, 8 : i32
    %304 = arith.index_cast %303 : i32 to index
    %c0_82 = arith.constant 0 : index
    %305 = vector.load %arg11[%304, %c0_82] : memref<64x128xf32, #tpu.memory_space<vmem>>, vector<8x128xf32>
    %306 = arith.truncf %301 : vector<8x32xf32> to vector<8x32xbf16>
    %cst_83 = arith.constant dense<0.000000e+00> : vector<8x128xf32>
    %307 = tpu.matmul %306, %230, %cst_83 {dimension_numbers = #tpu.dot_dimension_numbers<[1], [0], [0], [1], [0, 0, 1, 1], [], []>} : vector<8x32xbf16>, vector<32x128xbf16>, vector<8x128xf32> -> vector<8x128xf32>
    %308 = arith.addf %305, %307 : vector<8x128xf32>
    %309 = arith.negf %308 : vector<8x128xf32>
    %310 = math.exp %309 : vector<8x128xf32>
    %cst_84 = arith.constant 1.000000e+00 : f32
    %311 = vector.broadcast %cst_84 : f32 to vector<8x128xf32>
    %312 = arith.addf %311, %310 : vector<8x128xf32>
    %313 = arith.divf %311, %312 : vector<8x128xf32>
    %314 = math.tanh %308 : vector<8x128xf32>
    %315 = arith.select %2, %313, %314 : vector<8x128xi1>, vector<8x128xf32>
    %316 = vector.extract_strided_slice %315 {offsets = [0, 0], sizes = [8, 32], strides = [1, 1]} : vector<8x128xf32> to vector<8x32xf32>
    %317 = vector.extract_strided_slice %315 {offsets = [0, 32], sizes = [8, 32], strides = [1, 1]} : vector<8x128xf32> to vector<8x32xf32>
    %318 = vector.extract_strided_slice %315 {offsets = [0, 64], sizes = [8, 32], strides = [1, 1]} : vector<8x128xf32> to vector<8x32xf32>
    %319 = vector.extract_strided_slice %315 {offsets = [0, 96], sizes = [8, 32], strides = [1, 1]} : vector<8x128xf32> to vector<8x32xf32>
    %320 = arith.mulf %317, %299 : vector<8x32xf32>
    %321 = arith.mulf %316, %319 : vector<8x32xf32>
    %322 = arith.addf %320, %321 : vector<8x32xf32>
    %323 = math.tanh %322 : vector<8x32xf32>
    %324 = arith.mulf %318, %323 : vector<8x32xf32>
    %c4_i32_85 = arith.constant 4 : i32
    %c8_i32_86 = arith.constant 8 : i32
    %325 = arith.muli %c4_i32_85, %c8_i32_86 : i32
    %326 = tpu.assume_multiple %325, 8 : i32
    %327 = arith.index_cast %326 : i32 to index
    %c0_87 = arith.constant 0 : index
    %328 = vector.load %arg11[%327, %c0_87] : memref<64x128xf32, #tpu.memory_space<vmem>>, vector<8x128xf32>
    %329 = arith.truncf %324 : vector<8x32xf32> to vector<8x32xbf16>
    %cst_88 = arith.constant dense<0.000000e+00> : vector<8x128xf32>
    %330 = tpu.matmul %329, %230, %cst_88 {dimension_numbers = #tpu.dot_dimension_numbers<[1], [0], [0], [1], [0, 0, 1, 1], [], []>} : vector<8x32xbf16>, vector<32x128xbf16>, vector<8x128xf32> -> vector<8x128xf32>
    %331 = arith.addf %328, %330 : vector<8x128xf32>
    %332 = arith.negf %331 : vector<8x128xf32>
    %333 = math.exp %332 : vector<8x128xf32>
    %cst_89 = arith.constant 1.000000e+00 : f32
    %334 = vector.broadcast %cst_89 : f32 to vector<8x128xf32>
    %335 = arith.addf %334, %333 : vector<8x128xf32>
    %336 = arith.divf %334, %335 : vector<8x128xf32>
    %337 = math.tanh %331 : vector<8x128xf32>
    %338 = arith.select %2, %336, %337 : vector<8x128xi1>, vector<8x128xf32>
    %339 = vector.extract_strided_slice %338 {offsets = [0, 0], sizes = [8, 32], strides = [1, 1]} : vector<8x128xf32> to vector<8x32xf32>
    %340 = vector.extract_strided_slice %338 {offsets = [0, 32], sizes = [8, 32], strides = [1, 1]} : vector<8x128xf32> to vector<8x32xf32>
    %341 = vector.extract_strided_slice %338 {offsets = [0, 64], sizes = [8, 32], strides = [1, 1]} : vector<8x128xf32> to vector<8x32xf32>
    %342 = vector.extract_strided_slice %338 {offsets = [0, 96], sizes = [8, 32], strides = [1, 1]} : vector<8x128xf32> to vector<8x32xf32>
    %343 = arith.mulf %340, %322 : vector<8x32xf32>
    %344 = arith.mulf %339, %342 : vector<8x32xf32>
    %345 = arith.addf %343, %344 : vector<8x32xf32>
    %346 = math.tanh %345 : vector<8x32xf32>
    %347 = arith.mulf %341, %346 : vector<8x32xf32>
    %c5_i32_90 = arith.constant 5 : i32
    %c8_i32_91 = arith.constant 8 : i32
    %348 = arith.muli %c5_i32_90, %c8_i32_91 : i32
    %349 = tpu.assume_multiple %348, 8 : i32
    %350 = arith.index_cast %349 : i32 to index
    %c0_92 = arith.constant 0 : index
    %351 = vector.load %arg11[%350, %c0_92] : memref<64x128xf32, #tpu.memory_space<vmem>>, vector<8x128xf32>
    %352 = arith.truncf %347 : vector<8x32xf32> to vector<8x32xbf16>
    %cst_93 = arith.constant dense<0.000000e+00> : vector<8x128xf32>
    %353 = tpu.matmul %352, %230, %cst_93 {dimension_numbers = #tpu.dot_dimension_numbers<[1], [0], [0], [1], [0, 0, 1, 1], [], []>} : vector<8x32xbf16>, vector<32x128xbf16>, vector<8x128xf32> -> vector<8x128xf32>
    %354 = arith.addf %351, %353 : vector<8x128xf32>
    %355 = arith.negf %354 : vector<8x128xf32>
    %356 = math.exp %355 : vector<8x128xf32>
    %cst_94 = arith.constant 1.000000e+00 : f32
    %357 = vector.broadcast %cst_94 : f32 to vector<8x128xf32>
    %358 = arith.addf %357, %356 : vector<8x128xf32>
    %359 = arith.divf %357, %358 : vector<8x128xf32>
    %360 = math.tanh %354 : vector<8x128xf32>
    %361 = arith.select %2, %359, %360 : vector<8x128xi1>, vector<8x128xf32>
    %362 = vector.extract_strided_slice %361 {offsets = [0, 0], sizes = [8, 32], strides = [1, 1]} : vector<8x128xf32> to vector<8x32xf32>
    %363 = vector.extract_strided_slice %361 {offsets = [0, 32], sizes = [8, 32], strides = [1, 1]} : vector<8x128xf32> to vector<8x32xf32>
    %364 = vector.extract_strided_slice %361 {offsets = [0, 64], sizes = [8, 32], strides = [1, 1]} : vector<8x128xf32> to vector<8x32xf32>
    %365 = vector.extract_strided_slice %361 {offsets = [0, 96], sizes = [8, 32], strides = [1, 1]} : vector<8x128xf32> to vector<8x32xf32>
    %366 = arith.mulf %363, %345 : vector<8x32xf32>
    %367 = arith.mulf %362, %365 : vector<8x32xf32>
    %368 = arith.addf %366, %367 : vector<8x32xf32>
    %369 = math.tanh %368 : vector<8x32xf32>
    %370 = arith.mulf %364, %369 : vector<8x32xf32>
    %c6_i32_95 = arith.constant 6 : i32
    %c8_i32_96 = arith.constant 8 : i32
    %371 = arith.muli %c6_i32_95, %c8_i32_96 : i32
    %372 = tpu.assume_multiple %371, 8 : i32
    %373 = arith.index_cast %372 : i32 to index
    %c0_97 = arith.constant 0 : index
    %374 = vector.load %arg11[%373, %c0_97] : memref<64x128xf32, #tpu.memory_space<vmem>>, vector<8x128xf32>
    %375 = arith.truncf %370 : vector<8x32xf32> to vector<8x32xbf16>
    %cst_98 = arith.constant dense<0.000000e+00> : vector<8x128xf32>
    %376 = tpu.matmul %375, %230, %cst_98 {dimension_numbers = #tpu.dot_dimension_numbers<[1], [0], [0], [1], [0, 0, 1, 1], [], []>} : vector<8x32xbf16>, vector<32x128xbf16>, vector<8x128xf32> -> vector<8x128xf32>
    %377 = arith.addf %374, %376 : vector<8x128xf32>
    %378 = arith.negf %377 : vector<8x128xf32>
    %379 = math.exp %378 : vector<8x128xf32>
    %cst_99 = arith.constant 1.000000e+00 : f32
    %380 = vector.broadcast %cst_99 : f32 to vector<8x128xf32>
    %381 = arith.addf %380, %379 : vector<8x128xf32>
    %382 = arith.divf %380, %381 : vector<8x128xf32>
    %383 = math.tanh %377 : vector<8x128xf32>
    %384 = arith.select %2, %382, %383 : vector<8x128xi1>, vector<8x128xf32>
    %385 = vector.extract_strided_slice %384 {offsets = [0, 0], sizes = [8, 32], strides = [1, 1]} : vector<8x128xf32> to vector<8x32xf32>
    %386 = vector.extract_strided_slice %384 {offsets = [0, 32], sizes = [8, 32], strides = [1, 1]} : vector<8x128xf32> to vector<8x32xf32>
    %387 = vector.extract_strided_slice %384 {offsets = [0, 64], sizes = [8, 32], strides = [1, 1]} : vector<8x128xf32> to vector<8x32xf32>
    %388 = vector.extract_strided_slice %384 {offsets = [0, 96], sizes = [8, 32], strides = [1, 1]} : vector<8x128xf32> to vector<8x32xf32>
    %389 = arith.mulf %386, %368 : vector<8x32xf32>
    %390 = arith.mulf %385, %388 : vector<8x32xf32>
    %391 = arith.addf %389, %390 : vector<8x32xf32>
    %392 = math.tanh %391 : vector<8x32xf32>
    %393 = arith.mulf %387, %392 : vector<8x32xf32>
    %c7_i32_100 = arith.constant 7 : i32
    %c8_i32_101 = arith.constant 8 : i32
    %394 = arith.muli %c7_i32_100, %c8_i32_101 : i32
    %395 = tpu.assume_multiple %394, 8 : i32
    %396 = arith.index_cast %395 : i32 to index
    %c0_102 = arith.constant 0 : index
    %397 = vector.load %arg11[%396, %c0_102] : memref<64x128xf32, #tpu.memory_space<vmem>>, vector<8x128xf32>
    %398 = arith.truncf %393 : vector<8x32xf32> to vector<8x32xbf16>
    %cst_103 = arith.constant dense<0.000000e+00> : vector<8x128xf32>
    %399 = tpu.matmul %398, %230, %cst_103 {dimension_numbers = #tpu.dot_dimension_numbers<[1], [0], [0], [1], [0, 0, 1, 1], [], []>} : vector<8x32xbf16>, vector<32x128xbf16>, vector<8x128xf32> -> vector<8x128xf32>
    %400 = arith.addf %397, %399 : vector<8x128xf32>
    %401 = arith.negf %400 : vector<8x128xf32>
    %402 = math.exp %401 : vector<8x128xf32>
    %cst_104 = arith.constant 1.000000e+00 : f32
    %403 = vector.broadcast %cst_104 : f32 to vector<8x128xf32>
    %404 = arith.addf %403, %402 : vector<8x128xf32>
    %405 = arith.divf %403, %404 : vector<8x128xf32>
    %406 = math.tanh %400 : vector<8x128xf32>
    %407 = arith.select %2, %405, %406 : vector<8x128xi1>, vector<8x128xf32>
    %408 = vector.extract_strided_slice %407 {offsets = [0, 0], sizes = [8, 32], strides = [1, 1]} : vector<8x128xf32> to vector<8x32xf32>
    %409 = vector.extract_strided_slice %407 {offsets = [0, 32], sizes = [8, 32], strides = [1, 1]} : vector<8x128xf32> to vector<8x32xf32>
    %410 = vector.extract_strided_slice %407 {offsets = [0, 64], sizes = [8, 32], strides = [1, 1]} : vector<8x128xf32> to vector<8x32xf32>
    %411 = vector.extract_strided_slice %407 {offsets = [0, 96], sizes = [8, 32], strides = [1, 1]} : vector<8x128xf32> to vector<8x32xf32>
    %412 = arith.mulf %409, %391 : vector<8x32xf32>
    %413 = arith.mulf %408, %411 : vector<8x32xf32>
    %414 = arith.addf %412, %413 : vector<8x32xf32>
    %415 = math.tanh %414 : vector<8x32xf32>
    %416 = arith.mulf %410, %415 : vector<8x32xf32>
    %c8_i32_105 = arith.constant 8 : i32
    %417 = arith.truncf %416 : vector<8x32xf32> to vector<8x32xbf16>
    %c0_106 = arith.constant 0 : index
    %c0_107 = arith.constant 0 : index
    %418 = vector.load %arg8[%c0_106, %c0_107] : memref<32x128xbf16, #tpu.memory_space<vmem>>, vector<32x128xbf16>
    %cst_108 = arith.constant dense<0.000000e+00> : vector<8x128xf32>
    %419 = tpu.matmul %417, %418, %cst_108 {dimension_numbers = #tpu.dot_dimension_numbers<[1], [0], [0], [1], [0, 0, 1, 1], [], []>} : vector<8x32xbf16>, vector<32x128xbf16>, vector<8x128xf32> -> vector<8x128xf32>
    %c0_109 = arith.constant 0 : index
    %c0_110 = arith.constant 0 : index
    %420 = vector.load %arg9[%c0_109, %c0_110] : memref<1x128xf32, #tpu.memory_space<vmem>>, vector<1x128xf32>
    %421 = vector.broadcast %420 : vector<1x128xf32> to vector<8x128xf32>
    %422 = arith.addf %419, %421 : vector<8x128xf32>
    %c0_111 = arith.constant 0 : index
    %c0_112 = arith.constant 0 : index
    %423 = vector.load %arg10[%c0_111, %c0_112] : memref<8x128xf32, #tpu.memory_space<vmem>>, vector<8x128xf32>
    tpu.vector_store %arg10[%c0_111, %c0_112], %422 {strides = array<i32>} : memref<8x128xf32, #tpu.memory_space<vmem>>, vector<8x128xf32>,
    return
  }
  func.func @transform_0(%arg0: i32) -> (i32, i32, i32) {
    %c0_i32 = arith.constant 0 : i32
    %c0_i32_0 = arith.constant 0 : i32
    %c0_i32_1 = arith.constant 0 : i32
    return %c0_i32, %arg0, %c0_i32_0 : i32, i32, i32
  }
  func.func @transform_1(%arg0: i32) -> (i32, i32) {
    %c0_i32 = arith.constant 0 : i32
    %c0_i32_0 = arith.constant 0 : i32
    %c0_i32_1 = arith.constant 0 : i32
    return %c0_i32, %c0_i32_0 : i32, i32
  }
  func.func @transform_2(%arg0: i32) -> (i32, i32) {
    %c0_i32 = arith.constant 0 : i32
    %c0_i32_0 = arith.constant 0 : i32
    %c0_i32_1 = arith.constant 0 : i32
    return %c0_i32, %c0_i32_0 : i32, i32
  }
  func.func @transform_3(%arg0: i32) -> (i32, i32) {
    %c0_i32 = arith.constant 0 : i32
    %c0_i32_0 = arith.constant 0 : i32
    %c0_i32_1 = arith.constant 0 : i32
    return %c0_i32, %c0_i32_0 : i32, i32
  }
  func.func @transform_4(%arg0: i32) -> (i32, i32) {
    %c0_i32 = arith.constant 0 : i32
    %c0_i32_0 = arith.constant 0 : i32
    %c0_i32_1 = arith.constant 0 : i32
    return %c0_i32, %c0_i32_0 : i32, i32
  }
  func.func @transform_5(%arg0: i32) -> (i32, i32) {
    %c0_i32 = arith.constant 0 : i32
    %c0_i32_0 = arith.constant 0 : i32
    %c0_i32_1 = arith.constant 0 : i32
    return %c0_i32, %c0_i32_0 : i32, i32
  }
  func.func @transform_6(%arg0: i32) -> (i32, i32) {
    %c0_i32 = arith.constant 0 : i32
    %c0_i32_0 = arith.constant 0 : i32
    %c0_i32_1 = arith.constant 0 : i32
    return %c0_i32, %c0_i32_0 : i32, i32
  }
  func.func @transform_7(%arg0: i32) -> (i32, i32) {
    %c0_i32 = arith.constant 0 : i32
    %c0_i32_0 = arith.constant 0 : i32
    %c0_i32_1 = arith.constant 0 : i32
    return %c0_i32, %c0_i32_0 : i32, i32
  }
  func.func @transform_8(%arg0: i32) -> (i32, i32) {
    %c0_i32 = arith.constant 0 : i32
    %c0_i32_0 = arith.constant 0 : i32
    %c0_i32_1 = arith.constant 0 : i32
    return %c0_i32, %c0_i32_0 : i32, i32
  }
  func.func @transform_9(%arg0: i32) -> (i32, i32) {
    %c0_i32 = arith.constant 0 : i32
    %c0_i32_0 = arith.constant 0 : i32
    return %arg0, %c0_i32 : i32, i32
  }
}

</mosaic_0001>

<llo_original>
// kernel: lstm_model_forward.1
$region0: #{lstm_model_forward.1}
  #allocation0 [shape = 'u32[]', space=smem, size = 0x4, offset = 0x4, fixed_abs, tag = 'smem constant byte address 0x4 - core index']
  #allocation1 [shape = 'u32[144,128]{1,0:T(1,128)}', space=vmem, size = 0x12000, scoped, tag = 'internal scratch']
  #allocation2 [shape = 'f32[64,128]{1,0:T(8,128)}', space=vmem, size = 0x8000, scoped, tag = 'scratch operand']
  #allocation3 [shape = 'bf16[64,32]{1,0:T(8,128)(2,1)}', space=vmem, size = 0x4000, scoped, tag = 'scratch operand']
  %s0 = inlined_call_operand.vmem [shape: f32[8,8,16], index: 0, kind: input, shape index: {}]
  %s1 = inlined_call_operand.vmem [shape: bf16[16,128], index: 1, kind: input, shape index: {}]
  %s2 = inlined_call_operand.vmem [shape: bf16[32,128], index: 2, kind: input, shape index: {}]
  %s3 = inlined_call_operand.vmem [shape: f32[1,128], index: 3, kind: input, shape index: {}]
  %s4 = inlined_call_operand.vmem [shape: bf16[32,128], index: 4, kind: input, shape index: {}]
  %s5 = inlined_call_operand.vmem [shape: bf16[32,128], index: 5, kind: input, shape index: {}]
  %s6 = inlined_call_operand.vmem [shape: f32[1,128], index: 6, kind: input, shape index: {}]
  %s7 = inlined_call_operand.vmem [shape: bf16[32,128], index: 7, kind: input, shape index: {}]
  %s8 = inlined_call_operand.vmem [shape: f32[1,128], index: 8, kind: input, shape index: {}]
  %s9 = inlined_call_operand.vmem [shape: f32[8,128], index: 9, kind: output, shape index: {}]
  %s10 = sld [smem:[#allocation0]]
  $region46: #{lstm_model_forward.1} parent=0
    _
  %s12 = ssub.s32 1, %s10
  %s13 = scalar_select 0, %s12, %s10
  // Predicated region
  $region2: #{lstm_model_forward.1} parent=0 // pred_check
    _
  $region3: #{lstm_model_forward.1} parent=0 // pred_check_branch
    %15 = sbr.rel (0) target = $region5
  $region4: #{lstm_model_forward.1} parent=0 // pred_region
    _
  $region5: #{lstm_model_forward.1} parent=0 // pred_fallthru
    _
  // Predicated region
  $region6: #{lstm_model_forward.1} parent=0 // pred_check
    _
  $region7: #{lstm_model_forward.1} parent=0 // pred_check_branch
    %17 = sbr.rel (0) target = $region9
  $region8: #{lstm_model_forward.1} parent=0 // pred_region
    _
  $region9: #{lstm_model_forward.1} parent=0 // pred_fallthru
    _
  // Predicated region
  $region10: #{lstm_model_forward.1} parent=0 // pred_check
    _
  $region11: #{lstm_model_forward.1} parent=0 // pred_check_branch
    %19 = sbr.rel (0) target = $region13
  $region12: #{lstm_model_forward.1} parent=0 // pred_region
    _
  $region13: #{lstm_model_forward.1} parent=0 // pred_fallthru
    _
  // Predicated region
  $region14: #{lstm_model_forward.1} parent=0 // pred_check
    _
  $region15: #{lstm_model_forward.1} parent=0 // pred_check_branch
    %21 = sbr.rel (0) target = $region17
  $region16: #{lstm_model_forward.1} parent=0 // pred_region
    _
  $region17: #{lstm_model_forward.1} parent=0 // pred_fallthru
    _
  // Predicated region
  $region18: #{lstm_model_forward.1} parent=0 // pred_check
    _
  $region19: #{lstm_model_forward.1} parent=0 // pred_check_branch
    %23 = sbr.rel (0) target = $region21
  $region20: #{lstm_model_forward.1} parent=0 // pred_region
    _
  $region21: #{lstm_model_forward.1} parent=0 // pred_fallthru
    _
  // Predicated region
  $region22: #{lstm_model_forward.1} parent=0 // pred_check
    _
  $region23: #{lstm_model_forward.1} parent=0 // pred_check_branch
    %25 = sbr.rel (0) target = $region25
  $region24: #{lstm_model_forward.1} parent=0 // pred_region
    _
  $region25: #{lstm_model_forward.1} parent=0 // pred_fallthru
    _
  // Predicated region
  $region26: #{lstm_model_forward.1} parent=0 // pred_check
    _
  $region27: #{lstm_model_forward.1} parent=0 // pred_check_branch
    %27 = sbr.rel (0) target = $region29
  $region28: #{lstm_model_forward.1} parent=0 // pred_region
    _
  $region29: #{lstm_model_forward.1} parent=0 // pred_fallthru
    _
  // Predicated region
  $region30: #{lstm_model_forward.1} parent=0 // pred_check
    _
  $region31: #{lstm_model_forward.1} parent=0 // pred_check_branch
    %29 = sbr.rel (0) target = $region33
  $region32: #{lstm_model_forward.1} parent=0 // pred_region
    _
  $region33: #{lstm_model_forward.1} parent=0 // pred_fallthru
    _
  // Predicated region
  $region34: #{lstm_model_forward.1} parent=0 // pred_check
    _
  $region35: #{lstm_model_forward.1} parent=0 // pred_check_branch
    %31 = sbr.rel (0) target = $region37
  $region36: #{lstm_model_forward.1} parent=0 // pred_region
    _
  $region37: #{lstm_model_forward.1} parent=0 // pred_fallthru
    _
  %v33 = vlaneseq
  %v34 = vand.u32 %v33, 127
  %vm35 = vcmp.lt.s32.totalorder %v34, 96
  %v36 = vld [vmem:[%s0] sm:$0xff]
  %v37 = vld [vmem:[%s0 + $0x8] sm:$0xff]
  %v38 = vld [vmem:[%s0 + $0x10] sm:$0xff]
  %v39 = vld [vmem:[%s0 + $0x18] sm:$0xff]
  %v40 = vld [vmem:[%s0 + $0x20] sm:$0xff]
  %v41 = vld [vmem:[%s0 + $0x28] sm:$0xff]
  %v42 = vld [vmem:[%s0 + $0x30] sm:$0xff]
  %v43 = vld [vmem:[%s0 + $0x38] sm:$0xff]
  %v44 = vpack.c.bf16 %v37, %v36
  %v45 = vpack.c.bf16 %v39, %v38
  %v46 = vpack.c.bf16 %v41, %v40
  %v47 = vpack.c.bf16 %v43, %v42
  %v48 = vld [vmem:[%s1] sm:$0xf]
  %v49 = vld [vmem:[%s1 + $0x4] sm:$0xf]
  %v50 = vld [vmem:[%s3] sm:$0x1]
  %v52 = vlaneseq
  %v53 = vshrl.u32 %v52, 7
  %v54 = vsub.s32 0, %v53
  %v55 = vrot.slane %v50, %v54
  %v59 = vunpack.c.l.b16 %v48
  %v60 = vunpack.c.l.b16 %v49
  %v61 = vpack.c.b16 %v60, %v59
  %vm63 = vcmask 130048
  %v65 = vsel %vm63, %v44, 0
  %v68 = vsel %vm63, %v45, 0
  %v71 = vsel %vm63, %v46, 0
  %v74 = vsel %vm63, %v47, 0
  %76 = vmatprep.subr.bf16.mxu0 0
  %77 = vmatpush1.bf16.msra.mxu0 0
  %78 = vmatprep.subr.bf16.mxu0 0
  %79 = vmatpush1.bf16.msra.mxu0 0
  %80 = vmatprep.subr.bf16.mxu0 0
  %81 = vmatpush1.bf16.msra.mxu0 0
  %82 = vmatprep.subr.bf16.mxu0 0
  %83 = vmatpush1.bf16.msra.mxu0 0
  %84 = vmatprep.subr.bf16.mxu0 0
  %85 = vmatpush1.bf16.msra.mxu0 0
  %86 = vmatprep.subr.bf16.mxu0 0
  %87 = vmatpush1.bf16.msra.mxu0 0
  %88 = vmatprep.subr.bf16.mxu0 0
  %89 = vmatpush1.bf16.msra.mxu0 0
  %90 = vmatprep.subr.bf16.mxu0 0
  %91 = vmatpush1.bf16.msra.mxu0 %v61
  %92 = vmatprep.subr.bf16.mxu0 0
  %93 = vmatpush2.bf16.msra.mxu0 0
  %94 = vmatprep.subr.bf16.mxu0 0
  %95 = vmatpush2.bf16.msra.mxu0 0
  %96 = vmatprep.subr.bf16.mxu0 0
  %97 = vmatpush2.bf16.msra.mxu0 0
  %98 = vmatprep.subr.bf16.mxu0 0
  %99 = vmatpush2.bf16.msra.mxu0 0
  %100 = vmatprep.subr.bf16.mxu0 0
  %101 = vmatpush2.bf16.msra.mxu0 0
  %102 = vmatprep.subr.bf16.mxu0 0
  %103 = vmatpush2.bf16.msra.mxu0 0
  %104 = vmatprep.subr.bf16.mxu0 0
  %105 = vmatpush2.bf16.msra.mxu0 0
  %106 = vmatprep.subr.bf16.mxu0 0
  %107 = vmatpush2.bf16.msra.mxu0 0
  %108 = vmatprep.mubr.bf16.mxu0 0
  %109 = vmatmul.mubr.bf16.gmra.mxu0 %v65
  %v110 = vpop.f32.mrf.mxu0
  %v111 = vadd.f32 %v55, %v110
  %v112 = vpop.f32.mrf.mxu0
  %v113 = vpop.f32.mrf.mxu0
  %v114 = vadd.f32 %v55, %v113
  %v115 = vpop.f32.mrf.mxu0
  %116 = vmatprep.mubr.bf16.mxu0 0
  %117 = vmatmul.mubr.bf16.gmra.mxu0 %v68
  %v118 = vpop.f32.mrf.mxu0
  %v119 = vadd.f32 %v55, %v118
  %v120 = vpop.f32.mrf.mxu0
  %v121 = vpop.f32.mrf.mxu0
  %v122 = vadd.f32 %v55, %v121
  %v123 = vpop.f32.mrf.mxu0
  %124 = vmatprep.mubr.bf16.mxu0 0
  %125 = vmatmul.mubr.bf16.gmra.mxu0 %v71
  %v126 = vpop.f32.mrf.mxu0
  %v127 = vadd.f32 %v55, %v126
  %v128 = vpop.f32.mrf.mxu0
  %v129 = vpop.f32.mrf.mxu0
  %v130 = vadd.f32 %v55, %v129
  %v131 = vpop.f32.mrf.mxu0
  %132 = vmatprep.mubr.bf16.mxu0 0
  %133 = vmatmul.mubr.bf16.gmra.mxu0 %v74
  %v134 = vpop.f32.mrf.mxu0
  %v135 = vadd.f32 %v55, %v134
  %v136 = vpop.f32.mrf.mxu0
  %v137 = vpop.f32.mrf.mxu0
  %v138 = vadd.f32 %v55, %v137
  %v139 = vpop.f32.mrf.mxu0
  %140 = vdwg.mxu0
  %141 = vst [vmem:[#allocation2] sm:$0xff] %v111
  %142 = vst [vmem:[#allocation2 + $0x8] sm:$0xff] %v114
  %143 = vst [vmem:[#allocation2 + $0x10] sm:$0xff] %v119
  %144 = vst [vmem:[#allocation2 + $0x18] sm:$0xff] %v122
  %145 = vst [vmem:[#allocation2 + $0x20] sm:$0xff] %v127
  %146 = vst [vmem:[#allocation2 + $0x28] sm:$0xff] %v130
  %147 = vst [vmem:[#allocation2 + $0x30] sm:$0xff] %v135
  %148 = vst [vmem:[#allocation2 + $0x38] sm:$0xff] %v138
  %v149 = vld [vmem:[%s2] sm:$0xf]
  %v150 = vld [vmem:[%s2 + $0x4] sm:$0xf]
  %v151 = vld [vmem:[%s2 + $0x8] sm:$0xf]
  %v152 = vld [vmem:[%s2 + $0xc] sm:$0xf]
  %v153 = vld [vmem:[#allocation2] sm:$0xff]
  %v158 = vunpack.c.l.b16 %v149
  %v159 = vunpack.c.l.b16 %v150
  %v160 = vunpack.c.l.b16 %v151
  %v161 = vunpack.c.l.b16 %v152
  %v162 = vpack.c.b16 %v159, %v158
  %v163 = vpack.c.b16 %v161, %v160
  %vm166 = vcmask 261120
  %v168 = vsel %vm166, 0, 0
  %170 = vmatprep.subr.bf16.mxu0 0
  %171 = vmatpush1.bf16.msra.mxu0 0
  %172 = vmatprep.subr.bf16.mxu0 0
  %173 = vmatpush1.bf16.msra.mxu0 0
  %174 = vmatprep.subr.bf16.mxu0 0
  %175 = vmatpush1.bf16.msra.mxu0 0
  %176 = vmatprep.subr.bf16.mxu0 0
  %177 = vmatpush1.bf16.msra.mxu0 0
  %178 = vmatprep.subr.bf16.mxu0 0
  %179 = vmatpush1.bf16.msra.mxu0 0
  %180 = vmatprep.subr.bf16.mxu0 0
  %181 = vmatpush1.bf16.msra.mxu0 0
  %182 = vmatprep.subr.bf16.mxu0 0
  %183 = vmatpush1.bf16.msra.mxu0 %v163
  %184 = vmatprep.subr.bf16.mxu0 0
  %185 = vmatpush1.bf16.msra.mxu0 %v162
  %186 = vmatprep.subr.bf16.mxu0 0
  %187 = vmatpush2.bf16.msra.mxu0 0
  %188 = vmatprep.subr.bf16.mxu0 0
  %189 = vmatpush2.bf16.msra.mxu0 0
  %190 = vmatprep.subr.bf16.mxu0 0
  %191 = vmatpush2.bf16.msra.mxu0 0
  %192 = vmatprep.subr.bf16.mxu0 0
  %193 = vmatpush2.bf16.msra.mxu0 0
  %194 = vmatprep.subr.bf16.mxu0 0
  %195 = vmatpush2.bf16.msra.mxu0 0
  %196 = vmatprep.subr.bf16.mxu0 0
  %197 = vmatpush2.bf16.msra.mxu0 0
  %198 = vmatprep.subr.bf16.mxu0 0
  %199 = vmatpush2.bf16.msra.mxu0 0
  %200 = vmatprep.subr.bf16.mxu0 0
  %201 = vmatpush2.bf16.msra.mxu0 0
  %202 = vmatprep.mubr.bf16.mxu0 0
  %203 = vmatmul.mubr.bf16.gmra.mxu0 %v168
  %v204 = vpop.f32.mrf.mxu0
  %v205 = vadd.f32 0.0, %v204
  %v206 = vpop.f32.mrf.mxu0
  %v207 = vpop.f32.mrf.mxu0
  %v208 = vpop.f32.mrf.mxu0
  %209 = vdwg.mxu0
  %v210 = vadd.f32 %v153, %v205
  %v211 = vxor.u32 %v210, 2147483648
  %v212 = vmul.f32 %v211, 1.442695
  %v213 = vpow.pop %v212
  %v214 = vadd.f32 %v213, 1.0
  %v215 = vrcp.pop %v214
  %v216 = vmul.f32 1.0, %v215
  %v217 = vtanh.pop %v210
  %v218 = vsel %vm35, %v216, %v217
  %v219 = vmul.f32 %v218, 0.0
  %221 = vrot.lane.b32.xlu0 %v218, 32
  %v222 = vpop.permute.xlu0 %221
  %v224 = vmul.f32 %v218, %v222
  %226 = vrot.lane.b32.xlu0 %v224, 32
  %v227 = vpop.permute.xlu0 %226
  %v229 = vadd.f32 %v219, %v227
  %v230 = vtanh.pop %v229
  %232 = vrot.lane.b32.xlu0 %v230, 32
  %v233 = vpop.permute.xlu0 %232
  %v235 = vmul.f32 %v218, %v233
  %v236 = vpack.c.bf16 %v235, %v235
  %v238 = vunpack.c.l.b16 %v236
  %v239 = vpack.c.b16 %v238, %v238
  %240 = vrot.lane.b32.xlu0 %v239, 64
  %v241 = vpop.permute.xlu0 %240
  %vm243 = vcmask 257024
  %244 = vst.msk [vmem:[#allocation3] sm:$0xf] %vm243, %v241
  %s245 = scalar_lea.vmem [#allocation2], 8
  %v246 = vld [vmem:[%s245] sm:$0xff]
  %247 = vrot.lane.b32.xlu0 %v236, 64
  %v248 = vpop.permute.xlu0 %247
  %v250 = vsel %vm166, %v248, 0
  %252 = vmatprep.subr.bf16.mxu0 0
  %253 = vmatpush1.bf16.msra.mxu0 0
  %254 = vmatprep.subr.bf16.mxu0 0
  %255 = vmatpush1.bf16.msra.mxu0 0
  %256 = vmatprep.subr.bf16.mxu0 0
  %257 = vmatpush1.bf16.msra.mxu0 0
  %258 = vmatprep.subr.bf16.mxu0 0
  %259 = vmatpush1.bf16.msra.mxu0 0
  %260 = vmatprep.subr.bf16.mxu0 0
  %261 = vmatpush1.bf16.msra.mxu0 0
  %262 = vmatprep.subr.bf16.mxu0 0
  %263 = vmatpush1.bf16.msra.mxu0 0
  %264 = vmatprep.subr.bf16.mxu0 0
  %265 = vmatpush1.bf16.msra.mxu0 %v163
  %266 = vmatprep.subr.bf16.mxu0 0
  %267 = vmatpush1.bf16.msra.mxu0 %v162
  %268 = vmatprep.subr.bf16.mxu0 0
  %269 = vmatpush2.bf16.msra.mxu0 0
  %270 = vmatprep.subr.bf16.mxu0 0
  %271 = vmatpush2.bf16.msra.mxu0 0
  %272 = vmatprep.subr.bf16.mxu0 0
  %273 = vmatpush2.bf16.msra.mxu0 0
  %274 = vmatprep.subr.bf16.mxu0 0
  %275 = vmatpush2.bf16.msra.mxu0 0
  %276 = vmatprep.subr.bf16.mxu0 0
  %277 = vmatpush2.bf16.msra.mxu0 0
  %278 = vmatprep.subr.bf16.mxu0 0
  %279 = vmatpush2.bf16.msra.mxu0 0
  %280 = vmatprep.subr.bf16.mxu0 0
  %281 = vmatpush2.bf16.msra.mxu0 0
  %282 = vmatprep.subr.bf16.mxu0 0
  %283 = vmatpush2.bf16.msra.mxu0 0
  %284 = vmatprep.mubr.bf16.mxu0 0
  %285 = vmatmul.mubr.bf16.gmra.mxu0 %v250
  %v286 = vpop.f32.mrf.mxu0
  %v287 = vadd.f32 0.0, %v286
  %v288 = vpop.f32.mrf.mxu0
  %v289 = vpop.f32.mrf.mxu0
  %v290 = vpop.f32.mrf.mxu0
  %291 = vdwg.mxu0
  %v292 = vadd.f32 %v246, %v287
  %v293 = vxor.u32 %v292, 2147483648
  %v294 = vmul.f32 %v293, 1.442695
  %v295 = vpow.pop %v294
  %v296 = vadd.f32 %v295, 1.0
  %v297 = vrcp.pop %v296
  %v298 = vmul.f32 1.0, %v297
  %v299 = vtanh.pop %v292
  %v300 = vsel %vm35, %v298, %v299
  %v301 = vmul.f32 %v300, %v229
  %303 = vrot.lane.b32.xlu0 %v300, 32
  %v304 = vpop.permute.xlu0 %303
  %v306 = vmul.f32 %v300, %v304
  %308 = vrot.lane.b32.xlu0 %v306, 32
  %v309 = vpop.permute.xlu0 %308
  %v311 = vadd.f32 %v301, %v309
  %v312 = vtanh.pop %v311
  %314 = vrot.lane.b32.xlu0 %v312, 32
  %v315 = vpop.permute.xlu0 %314
  %v317 = vmul.f32 %v300, %v315
  %v318 = vpack.c.bf16 %v317, %v317
  %v320 = vunpack.c.l.b16 %v318
  %v321 = vpack.c.b16 %v320, %v320
  %322 = vrot.lane.b32.xlu0 %v321, 64
  %v323 = vpop.permute.xlu0 %322
  %s325 = scalar_lea.vmem [#allocation3], 4
  %326 = vst.msk [vmem:[%s325] sm:$0xf] %vm243, %v323
  %s327 = scalar_lea.vmem [#allocation2], 16
  %v328 = vld [vmem:[%s327] sm:$0xff]
  %329 = vrot.lane.b32.xlu0 %v318, 64
  %v330 = vpop.permute.xlu0 %329
  %v332 = vsel %vm166, %v330, 0
  %334 = vmatprep.subr.bf16.mxu0 0
  %335 = vmatpush1.bf16.msra.mxu0 0
  %336 = vmatprep.subr.bf16.mxu0 0
  %337 = vmatpush1.bf16.msra.mxu0 0
  %338 = vmatprep.subr.bf16.mxu0 0
  %339 = vmatpush1.bf16.msra.mxu0 0
  %340 = vmatprep.subr.bf16.mxu0 0
  %341 = vmatpush1.bf16.msra.mxu0 0
  %342 = vmatprep.subr.bf16.mxu0 0
  %343 = vmatpush1.bf16.msra.mxu0 0
  %344 = vmatprep.subr.bf16.mxu0 0
  %345 = vmatpush1.bf16.msra.mxu0 0
  %346 = vmatprep.subr.bf16.mxu0 0
  %347 = vmatpush1.bf16.msra.mxu0 %v163
  %348 = vmatprep.subr.bf16.mxu0 0
  %349 = vmatpush1.bf16.msra.mxu0 %v162
  %350 = vmatprep.subr.bf16.mxu0 0
  %351 = vmatpush2.bf16.msra.mxu0 0
  %352 = vmatprep.subr.bf16.mxu0 0
  %353 = vmatpush2.bf16.msra.mxu0 0
  %354 = vmatprep.subr.bf16.mxu0 0
  %355 = vmatpush2.bf16.msra.mxu0 0
  %356 = vmatprep.subr.bf16.mxu0 0
  %357 = vmatpush2.bf16.msra.mxu0 0
  %358 = vmatprep.subr.bf16.mxu0 0
  %359 = vmatpush2.bf16.msra.mxu0 0
  %360 = vmatprep.subr.bf16.mxu0 0
  %361 = vmatpush2.bf16.msra.mxu0 0
  %362 = vmatprep.subr.bf16.mxu0 0
  %363 = vmatpush2.bf16.msra.mxu0 0
  %364 = vmatprep.subr.bf16.mxu0 0
  %365 = vmatpush2.bf16.msra.mxu0 0
  %366 = vmatprep.mubr.bf16.mxu0 0
  %367 = vmatmul.mubr.bf16.gmra.mxu0 %v332
  %v368 = vpop.f32.mrf.mxu0
  %v369 = vadd.f32 0.0, %v368
  %v370 = vpop.f32.mrf.mxu0
  %v371 = vpop.f32.mrf.mxu0
  %v372 = vpop.f32.mrf.mxu0
  %373 = vdwg.mxu0
  %v374 = vadd.f32 %v328, %v369
  %v375 = vxor.u32 %v374, 2147483648
  %v376 = vmul.f32 %v375, 1.442695
  %v377 = vpow.pop %v376
  %v378 = vadd.f32 %v377, 1.0
  %v379 = vrcp.pop %v378
  %v380 = vmul.f32 1.0, %v379
  %v381 = vtanh.pop %v374
  %v382 = vsel %vm35, %v380, %v381
  %v383 = vmul.f32 %v382, %v311
  %385 = vrot.lane.b32.xlu0 %v382, 32
  %v386 = vpop.permute.xlu0 %385
  %v388 = vmul.f32 %v382, %v386
  %390 = vrot.lane.b32.xlu0 %v388, 32
  %v391 = vpop.permute.xlu0 %390
  %v393 = vadd.f32 %v383, %v391
  %v394 = vtanh.pop %v393
  %396 = vrot.lane.b32.xlu0 %v394, 32
  %v397 = vpop.permute.xlu0 %396
  %v399 = vmul.f32 %v382, %v397
  %v400 = vpack.c.bf16 %v399, %v399
  %v402 = vunpack.c.l.b16 %v400
  %v403 = vpack.c.b16 %v402, %v402
  %404 = vrot.lane.b32.xlu0 %v403, 64
  %v405 = vpop.permute.xlu0 %404
  %s407 = scalar_lea.vmem [#allocation3], 8
  %408 = vst.msk [vmem:[%s407] sm:$0xf] %vm243, %v405
  %s409 = scalar_lea.vmem [#allocation2], 24
  %v410 = vld [vmem:[%s409] sm:$0xff]
  %411 = vrot.lane.b32.xlu0 %v400, 64
  %v412 = vpop.permute.xlu0 %411
  %v414 = vsel %vm166, %v412, 0
  %416 = vmatprep.subr.bf16.mxu0 0
  %417 = vmatpush1.bf16.msra.mxu0 0
  %418 = vmatprep.subr.bf16.mxu0 0
  %419 = vmatpush1.bf16.msra.mxu0 0
  %420 = vmatprep.subr.bf16.mxu0 0
  %421 = vmatpush1.bf16.msra.mxu0 0
  %422 = vmatprep.subr.bf16.mxu0 0
  %423 = vmatpush1.bf16.msra.mxu0 0
  %424 = vmatprep.subr.bf16.mxu0 0
  %425 = vmatpush1.bf16.msra.mxu0 0
  %426 = vmatprep.subr.bf16.mxu0 0
  %427 = vmatpush1.bf16.msra.mxu0 0
  %428 = vmatprep.subr.bf16.mxu0 0
  %429 = vmatpush1.bf16.msra.mxu0 %v163
  %430 = vmatprep.subr.bf16.mxu0 0
  %431 = vmatpush1.bf16.msra.mxu0 %v162
  %432 = vmatprep.subr.bf16.mxu0 0
  %433 = vmatpush2.bf16.msra.mxu0 0
  %434 = vmatprep.subr.bf16.mxu0 0
  %435 = vmatpush2.bf16.msra.mxu0 0
  %436 = vmatprep.subr.bf16.mxu0 0
  %437 = vmatpush2.bf16.msra.mxu0 0
  %438 = vmatprep.subr.bf16.mxu0 0
  %439 = vmatpush2.bf16.msra.mxu0 0
  %440 = vmatprep.subr.bf16.mxu0 0
  %441 = vmatpush2.bf16.msra.mxu0 0
  %442 = vmatprep.subr.bf16.mxu0 0
  %443 = vmatpush2.bf16.msra.mxu0 0
  %444 = vmatprep.subr.bf16.mxu0 0
  %445 = vmatpush2.bf16.msra.mxu0 0
  %446 = vmatprep.subr.bf16.mxu0 0
  %447 = vmatpush2.bf16.msra.mxu0 0
  %448 = vmatprep.mubr.bf16.mxu0 0
  %449 = vmatmul.mubr.bf16.gmra.mxu0 %v414
  %v450 = vpop.f32.mrf.mxu0
  %v451 = vadd.f32 0.0, %v450
  %v452 = vpop.f32.mrf.mxu0
  %v453 = vpop.f32.mrf.mxu0
  %v454 = vpop.f32.mrf.mxu0
  %455 = vdwg.mxu0
  %v456 = vadd.f32 %v410, %v451
  %v457 = vxor.u32 %v456, 2147483648
  %v458 = vmul.f32 %v457, 1.442695
  %v459 = vpow.pop %v458
  %v460 = vadd.f32 %v459, 1.0
  %v461 = vrcp.pop %v460
  %v462 = vmul.f32 1.0, %v461
  %v463 = vtanh.pop %v456
  %v464 = vsel %vm35, %v462, %v463
  %v465 = vmul.f32 %v464, %v393
  %467 = vrot.lane.b32.xlu0 %v464, 32
  %v468 = vpop.permute.xlu0 %467
  %v470 = vmul.f32 %v464, %v468
  %472 = vrot.lane.b32.xlu0 %v470, 32
  %v473 = vpop.permute.xlu0 %472
  %v475 = vadd.f32 %v465, %v473
  %v476 = vtanh.pop %v475
  %478 = vrot.lane.b32.xlu0 %v476, 32
  %v479 = vpop.permute.xlu0 %478
  %v481 = vmul.f32 %v464, %v479
  %v482 = vpack.c.bf16 %v481, %v481
  %v484 = vunpack.c.l.b16 %v482
  %v485 = vpack.c.b16 %v484, %v484
  %486 = vrot.lane.b32.xlu0 %v485, 64
  %v487 = vpop.permute.xlu0 %486
  %s489 = scalar_lea.vmem [#allocation3], 12
  %490 = vst.msk [vmem:[%s489] sm:$0xf] %vm243, %v487
  %s491 = scalar_lea.vmem [#allocation2], 32
  %v492 = vld [vmem:[%s491] sm:$0xff]
  %493 = vrot.lane.b32.xlu0 %v482, 64
  %v494 = vpop.permute.xlu0 %493
  %v496 = vsel %vm166, %v494, 0
  %498 = vmatprep.subr.bf16.mxu0 0
  %499 = vmatpush1.bf16.msra.mxu0 0
  %500 = vmatprep.subr.bf16.mxu0 0
  %501 = vmatpush1.bf16.msra.mxu0 0
  %502 = vmatprep.subr.bf16.mxu0 0
  %503 = vmatpush1.bf16.msra.mxu0 0
  %504 = vmatprep.subr.bf16.mxu0 0
  %505 = vmatpush1.bf16.msra.mxu0 0
  %506 = vmatprep.subr.bf16.mxu0 0
  %507 = vmatpush1.bf16.msra.mxu0 0
  %508 = vmatprep.subr.bf16.mxu0 0
  %509 = vmatpush1.bf16.msra.mxu0 0
  %510 = vmatprep.subr.bf16.mxu0 0
  %511 = vmatpush1.bf16.msra.mxu0 %v163
  %512 = vmatprep.subr.bf16.mxu0 0
  %513 = vmatpush1.bf16.msra.mxu0 %v162
  %514 = vmatprep.subr.bf16.mxu0 0
  %515 = vmatpush2.bf16.msra.mxu0 0
  %516 = vmatprep.subr.bf16.mxu0 0
  %517 = vmatpush2.bf16.msra.mxu0 0
  %518 = vmatprep.subr.bf16.mxu0 0
  %519 = vmatpush2.bf16.msra.mxu0 0
  %520 = vmatprep.subr.bf16.mxu0 0
  %521 = vmatpush2.bf16.msra.mxu0 0
  %522 = vmatprep.subr.bf16.mxu0 0
  %523 = vmatpush2.bf16.msra.mxu0 0
  %524 = vmatprep.subr.bf16.mxu0 0
  %525 = vmatpush2.bf16.msra.mxu0 0
  %526 = vmatprep.subr.bf16.mxu0 0
  %527 = vmatpush2.bf16.msra.mxu0 0
  %528 = vmatprep.subr.bf16.mxu0 0
  %529 = vmatpush2.bf16.msra.mxu0 0
  %530 = vmatprep.mubr.bf16.mxu0 0
  %531 = vmatmul.mubr.bf16.gmra.mxu0 %v496
  %v532 = vpop.f32.mrf.mxu0
  %v533 = vadd.f32 0.0, %v532
  %v534 = vpop.f32.mrf.mxu0
  %v535 = vpop.f32.mrf.mxu0
  %v536 = vpop.f32.mrf.mxu0
  %537 = vdwg.mxu0
  %v538 = vadd.f32 %v492, %v533
  %v539 = vxor.u32 %v538, 2147483648
  %v540 = vmul.f32 %v539, 1.442695
  %v541 = vpow.pop %v540
  %v542 = vadd.f32 %v541, 1.0
  %v543 = vrcp.pop %v542
  %v544 = vmul.f32 1.0, %v543
  %v545 = vtanh.pop %v538
  %v546 = vsel %vm35, %v544, %v545
  %v547 = vmul.f32 %v546, %v475
  %549 = vrot.lane.b32.xlu0 %v546, 32
  %v550 = vpop.permute.xlu0 %549
  %v552 = vmul.f32 %v546, %v550
  %554 = vrot.lane.b32.xlu0 %v552, 32
  %v555 = vpop.permute.xlu0 %554
  %v557 = vadd.f32 %v547, %v555
  %v558 = vtanh.pop %v557
  %560 = vrot.lane.b32.xlu0 %v558, 32
  %v561 = vpop.permute.xlu0 %560
  %v563 = vmul.f32 %v546, %v561
  %v564 = vpack.c.bf16 %v563, %v563
  %v566 = vunpack.c.l.b16 %v564
  %v567 = vpack.c.b16 %v566, %v566
  %568 = vrot.lane.b32.xlu0 %v567, 64
  %v569 = vpop.permute.xlu0 %568
  %s571 = scalar_lea.vmem [#allocation3], 16
  %572 = vst.msk [vmem:[%s571] sm:$0xf] %vm243, %v569
  %s573 = scalar_lea.vmem [#allocation2], 40
  %v574 = vld [vmem:[%s573] sm:$0xff]
  %575 = vrot.lane.b32.xlu0 %v564, 64
  %v576 = vpop.permute.xlu0 %575
  %v578 = vsel %vm166, %v576, 0
  %580 = vmatprep.subr.bf16.mxu0 0
  %581 = vmatpush1.bf16.msra.mxu0 0
  %582 = vmatprep.subr.bf16.mxu0 0
  %583 = vmatpush1.bf16.msra.mxu0 0
  %584 = vmatprep.subr.bf16.mxu0 0
  %585 = vmatpush1.bf16.msra.mxu0 0
  %586 = vmatprep.subr.bf16.mxu0 0
  %587 = vmatpush1.bf16.msra.mxu0 0
  %588 = vmatprep.subr.bf16.mxu0 0
  %589 = vmatpush1.bf16.msra.mxu0 0
  %590 = vmatprep.subr.bf16.mxu0 0
  %591 = vmatpush1.bf16.msra.mxu0 0
  %592 = vmatprep.subr.bf16.mxu0 0
  %593 = vmatpush1.bf16.msra.mxu0 %v163
  %594 = vmatprep.subr.bf16.mxu0 0
  %595 = vmatpush1.bf16.msra.mxu0 %v162
  %596 = vmatprep.subr.bf16.mxu0 0
  %597 = vmatpush2.bf16.msra.mxu0 0
  %598 = vmatprep.subr.bf16.mxu0 0
  %599 = vmatpush2.bf16.msra.mxu0 0
  %600 = vmatprep.subr.bf16.mxu0 0
  %601 = vmatpush2.bf16.msra.mxu0 0
  %602 = vmatprep.subr.bf16.mxu0 0
  %603 = vmatpush2.bf16.msra.mxu0 0
  %604 = vmatprep.subr.bf16.mxu0 0
  %605 = vmatpush2.bf16.msra.mxu0 0
  %606 = vmatprep.subr.bf16.mxu0 0
  %607 = vmatpush2.bf16.msra.mxu0 0
  %608 = vmatprep.subr.bf16.mxu0 0
  %609 = vmatpush2.bf16.msra.mxu0 0
  %610 = vmatprep.subr.bf16.mxu0 0
  %611 = vmatpush2.bf16.msra.mxu0 0
  %612 = vmatprep.mubr.bf16.mxu0 0
  %613 = vmatmul.mubr.bf16.gmra.mxu0 %v578
  %v614 = vpop.f32.mrf.mxu0
  %v615 = vadd.f32 0.0, %v614
  %v616 = vpop.f32.mrf.mxu0
  %v617 = vpop.f32.mrf.mxu0
  %v618 = vpop.f32.mrf.mxu0
  %619 = vdwg.mxu0
  %v620 = vadd.f32 %v574, %v615
  %v621 = vxor.u32 %v620, 2147483648
  %v622 = vmul.f32 %v621, 1.442695
  %v623 = vpow.pop %v622
  %v624 = vadd.f32 %v623, 1.0
  %v625 = vrcp.pop %v624
  %v626 = vmul.f32 1.0, %v625
  %v627 = vtanh.pop %v620
  %v628 = vsel %vm35, %v626, %v627
  %v629 = vmul.f32 %v628, %v557
  %631 = vrot.lane.b32.xlu0 %v628, 32
  %v632 = vpop.permute.xlu0 %631
  %v634 = vmul.f32 %v628, %v632
  %636 = vrot.lane.b32.xlu0 %v634, 32
  %v637 = vpop.permute.xlu0 %636
  %v639 = vadd.f32 %v629, %v637
  %v640 = vtanh.pop %v639
  %642 = vrot.lane.b32.xlu0 %v640, 32
  %v643 = vpop.permute.xlu0 %642
  %v645 = vmul.f32 %v628, %v643
  %v646 = vpack.c.bf16 %v645, %v645
  %v648 = vunpack.c.l.b16 %v646
  %v649 = vpack.c.b16 %v648, %v648
  %650 = vrot.lane.b32.xlu0 %v649, 64
  %v651 = vpop.permute.xlu0 %650
  %s653 = scalar_lea.vmem [#allocation3], 20
  %654 = vst.msk [vmem:[%s653] sm:$0xf] %vm243, %v651
  %s655 = scalar_lea.vmem [#allocation2], 48
  %v656 = vld [vmem:[%s655] sm:$0xff]
  %657 = vrot.lane.b32.xlu0 %v646, 64
  %v658 = vpop.permute.xlu0 %657
  %v660 = vsel %vm166, %v658, 0
  %662 = vmatprep.subr.bf16.mxu0 0
  %663 = vmatpush1.bf16.msra.mxu0 0
  %664 = vmatprep.subr.bf16.mxu0 0
  %665 = vmatpush1.bf16.msra.mxu0 0
  %666 = vmatprep.subr.bf16.mxu0 0
  %667 = vmatpush1.bf16.msra.mxu0 0
  %668 = vmatprep.subr.bf16.mxu0 0
  %669 = vmatpush1.bf16.msra.mxu0 0
  %670 = vmatprep.subr.bf16.mxu0 0
  %671 = vmatpush1.bf16.msra.mxu0 0
  %672 = vmatprep.subr.bf16.mxu0 0
  %673 = vmatpush1.bf16.msra.mxu0 0
  %674 = vmatprep.subr.bf16.mxu0 0
  %675 = vmatpush1.bf16.msra.mxu0 %v163
  %676 = vmatprep.subr.bf16.mxu0 0
  %677 = vmatpush1.bf16.msra.mxu0 %v162
  %678 = vmatprep.subr.bf16.mxu0 0
  %679 = vmatpush2.bf16.msra.mxu0 0
  %680 = vmatprep.subr.bf16.mxu0 0
  %681 = vmatpush2.bf16.msra.mxu0 0
  %682 = vmatprep.subr.bf16.mxu0 0
  %683 = vmatpush2.bf16.msra.mxu0 0
  %684 = vmatprep.subr.bf16.mxu0 0
  %685 = vmatpush2.bf16.msra.mxu0 0
  %686 = vmatprep.subr.bf16.mxu0 0
  %687 = vmatpush2.bf16.msra.mxu0 0
  %688 = vmatprep.subr.bf16.mxu0 0
  %689 = vmatpush2.bf16.msra.mxu0 0
  %690 = vmatprep.subr.bf16.mxu0 0
  %691 = vmatpush2.bf16.msra.mxu0 0
  %692 = vmatprep.subr.bf16.mxu0 0
  %693 = vmatpush2.bf16.msra.mxu0 0
  %694 = vmatprep.mubr.bf16.mxu0 0
  %695 = vmatmul.mubr.bf16.gmra.mxu0 %v660
  %v696 = vpop.f32.mrf.mxu0
  %v697 = vadd.f32 0.0, %v696
  %v698 = vpop.f32.mrf.mxu0
  %v699 = vpop.f32.mrf.mxu0
  %v700 = vpop.f32.mrf.mxu0
  %701 = vdwg.mxu0
  %v702 = vadd.f32 %v656, %v697
  %v703 = vxor.u32 %v702, 2147483648
  %v704 = vmul.f32 %v703, 1.442695
  %v705 = vpow.pop %v704
  %v706 = vadd.f32 %v705, 1.0
  %v707 = vrcp.pop %v706
  %v708 = vmul.f32 1.0, %v707
  %v709 = vtanh.pop %v702
  %v710 = vsel %vm35, %v708, %v709
  %v711 = vmul.f32 %v710, %v639
  %713 = vrot.lane.b32.xlu0 %v710, 32
  %v714 = vpop.permute.xlu0 %713
  %v716 = vmul.f32 %v710, %v714
  %718 = vrot.lane.b32.xlu0 %v716, 32
  %v719 = vpop.permute.xlu0 %718
  %v721 = vadd.f32 %v711, %v719
  %v722 = vtanh.pop %v721
  %724 = vrot.lane.b32.xlu0 %v722, 32
  %v725 = vpop.permute.xlu0 %724
  %v727 = vmul.f32 %v710, %v725
  %v728 = vpack.c.bf16 %v727, %v727
  %v730 = vunpack.c.l.b16 %v728
  %v731 = vpack.c.b16 %v730, %v730
  %732 = vrot.lane.b32.xlu0 %v731, 64
  %v733 = vpop.permute.xlu0 %732
  %s735 = scalar_lea.vmem [#allocation3], 24
  %736 = vst.msk [vmem:[%s735] sm:$0xf] %vm243, %v733
  %s737 = scalar_lea.vmem [#allocation2], 56
  %v738 = vld [vmem:[%s737] sm:$0xff]
  %739 = vrot.lane.b32.xlu0 %v728, 64
  %v740 = vpop.permute.xlu0 %739
  %v742 = vsel %vm166, %v740, 0
  %744 = vmatprep.subr.bf16.mxu0 0
  %745 = vmatpush1.bf16.msra.mxu0 0
  %746 = vmatprep.subr.bf16.mxu0 0
  %747 = vmatpush1.bf16.msra.mxu0 0
  %748 = vmatprep.subr.bf16.mxu0 0
  %749 = vmatpush1.bf16.msra.mxu0 0
  %750 = vmatprep.subr.bf16.mxu0 0
  %751 = vmatpush1.bf16.msra.mxu0 0
  %752 = vmatprep.subr.bf16.mxu0 0
  %753 = vmatpush1.bf16.msra.mxu0 0
  %754 = vmatprep.subr.bf16.mxu0 0
  %755 = vmatpush1.bf16.msra.mxu0 0
  %756 = vmatprep.subr.bf16.mxu0 0
  %757 = vmatpush1.bf16.msra.mxu0 %v163
  %758 = vmatprep.subr.bf16.mxu0 0
  %759 = vmatpush1.bf16.msra.mxu0 %v162
  %760 = vmatprep.subr.bf16.mxu0 0
  %761 = vmatpush2.bf16.msra.mxu0 0
  %762 = vmatprep.subr.bf16.mxu0 0
  %763 = vmatpush2.bf16.msra.mxu0 0
  %764 = vmatprep.subr.bf16.mxu0 0
  %765 = vmatpush2.bf16.msra.mxu0 0
  %766 = vmatprep.subr.bf16.mxu0 0
  %767 = vmatpush2.bf16.msra.mxu0 0
  %768 = vmatprep.subr.bf16.mxu0 0
  %769 = vmatpush2.bf16.msra.mxu0 0
  %770 = vmatprep.subr.bf16.mxu0 0
  %771 = vmatpush2.bf16.msra.mxu0 0
  %772 = vmatprep.subr.bf16.mxu0 0
  %773 = vmatpush2.bf16.msra.mxu0 0
  %774 = vmatprep.subr.bf16.mxu0 0
  %775 = vmatpush2.bf16.msra.mxu0 0
  %776 = vmatprep.mubr.bf16.mxu0 0
  %777 = vmatmul.mubr.bf16.gmra.mxu0 %v742
  %v778 = vpop.f32.mrf.mxu0
  %v779 = vadd.f32 0.0, %v778
  %v780 = vpop.f32.mrf.mxu0
  %v781 = vpop.f32.mrf.mxu0
  %v782 = vpop.f32.mrf.mxu0
  %783 = vdwg.mxu0
  %v784 = vadd.f32 %v738, %v779
  %v785 = vxor.u32 %v784, 2147483648
  %v786 = vmul.f32 %v785, 1.442695
  %v787 = vpow.pop %v786
  %v788 = vadd.f32 %v787, 1.0
  %v789 = vrcp.pop %v788
  %v790 = vmul.f32 1.0, %v789
  %v791 = vtanh.pop %v784
  %v792 = vsel %vm35, %v790, %v791
  %v793 = vmul.f32 %v792, %v721
  %795 = vrot.lane.b32.xlu0 %v792, 32
  %v796 = vpop.permute.xlu0 %795
  %v798 = vmul.f32 %v792, %v796
  %800 = vrot.lane.b32.xlu0 %v798, 32
  %v801 = vpop.permute.xlu0 %800
  %v803 = vadd.f32 %v793, %v801
  %v804 = vtanh.pop %v803
  %806 = vrot.lane.b32.xlu0 %v804, 32
  %v807 = vpop.permute.xlu0 %806
  %v809 = vmul.f32 %v792, %v807
  %v810 = vpack.c.bf16 %v809, %v809
  %v812 = vunpack.c.l.b16 %v810
  %v813 = vpack.c.b16 %v812, %v812
  %814 = vrot.lane.b32.xlu0 %v813, 64
  %v815 = vpop.permute.xlu0 %814
  %s817 = scalar_lea.vmem [#allocation3], 28
  %818 = vst.msk [vmem:[%s817] sm:$0xf] %vm243, %v815
  %v819 = vld [vmem:[#allocation3] sm:$0xf]
  %v820 = vld [vmem:[#allocation3 + $0x4] sm:$0xf]
  %v821 = vld [vmem:[#allocation3 + $0x8] sm:$0xf]
  %v822 = vld [vmem:[#allocation3 + $0xc] sm:$0xf]
  %v823 = vld [vmem:[#allocation3 + $0x10] sm:$0xf]
  %v824 = vld [vmem:[#allocation3 + $0x14] sm:$0xf]
  %v825 = vld [vmem:[#allocation3 + $0x18] sm:$0xf]
  %v826 = vld [vmem:[#allocation3 + $0x1c] sm:$0xf]
  %v827 = vld [vmem:[%s4] sm:$0xf]
  %v828 = vld [vmem:[%s4 + $0x4] sm:$0xf]
  %v829 = vld [vmem:[%s4 + $0x8] sm:$0xf]
  %v830 = vld [vmem:[%s4 + $0xc] sm:$0xf]
  %v831 = vld [vmem:[%s6] sm:$0x1]
  %v833 = vlaneseq
  %v834 = vshrl.u32 %v833, 7
  %v835 = vsub.s32 0, %v834
  %v836 = vrot.slane %v831, %v835
  %v846 = vunpack.c.l.b16 %v819
  %v847 = vunpack.c.l.b16 %v820
  %v848 = vunpack.c.l.b16 %v821
  %v849 = vunpack.c.l.b16 %v822
  %v850 = vunpack.c.l.b16 %v823
  %v851 = vunpack.c.l.b16 %v824
  %v852 = vunpack.c.l.b16 %v825
  %v853 = vunpack.c.l.b16 %v826
  %v854 = vpack.c.b16 %v847, %v846
  %v855 = vpack.c.b16 %v849, %v848
  %v856 = vpack.c.b16 %v851, %v850
  %v857 = vpack.c.b16 %v853, %v852
  %v862 = vunpack.c.l.b16 %v827
  %v863 = vunpack.c.l.b16 %v828
  %v864 = vunpack.c.l.b16 %v829
  %v865 = vunpack.c.l.b16 %v830
  %v866 = vpack.c.b16 %v863, %v862
  %v867 = vpack.c.b16 %v865, %v864
  %v871 = vsel %vm166, %v854, 0
  %v874 = vsel %vm166, %v855, 0
  %v877 = vsel %vm166, %v856, 0
  %v880 = vsel %vm166, %v857, 0
  %882 = vmatprep.subr.bf16.mxu0 0
  %883 = vmatpush1.bf16.msra.mxu0 0
  %884 = vmatprep.subr.bf16.mxu0 0
  %885 = vmatpush1.bf16.msra.mxu0 0
  %886 = vmatprep.subr.bf16.mxu0 0
  %887 = vmatpush1.bf16.msra.mxu0 0
  %888 = vmatprep.subr.bf16.mxu0 0
  %889 = vmatpush1.bf16.msra.mxu0 0
  %890 = vmatprep.subr.bf16.mxu0 0
  %891 = vmatpush1.bf16.msra.mxu0 0
  %892 = vmatprep.subr.bf16.mxu0 0
  %893 = vmatpush1.bf16.msra.mxu0 0
  %894 = vmatprep.subr.bf16.mxu0 0
  %895 = vmatpush1.bf16.msra.mxu0 %v867
  %896 = vmatprep.subr.bf16.mxu0 0
  %897 = vmatpush1.bf16.msra.mxu0 %v866
  %898 = vmatprep.subr.bf16.mxu0 0
  %899 = vmatpush2.bf16.msra.mxu0 0
  %900 = vmatprep.subr.bf16.mxu0 0
  %901 = vmatpush2.bf16.msra.mxu0 0
  %902 = vmatprep.subr.bf16.mxu0 0
  %903 = vmatpush2.bf16.msra.mxu0 0
  %904 = vmatprep.subr.bf16.mxu0 0
  %905 = vmatpush2.bf16.msra.mxu0 0
  %906 = vmatprep.subr.bf16.mxu0 0
  %907 = vmatpush2.bf16.msra.mxu0 0
  %908 = vmatprep.subr.bf16.mxu0 0
  %909 = vmatpush2.bf16.msra.mxu0 0
  %910 = vmatprep.subr.bf16.mxu0 0
  %911 = vmatpush2.bf16.msra.mxu0 0
  %912 = vmatprep.subr.bf16.mxu0 0
  %913 = vmatpush2.bf16.msra.mxu0 0
  %914 = vmatprep.mubr.bf16.mxu0 0
  %915 = vmatmul.mubr.bf16.gmra.mxu0 %v871
  %v916 = vpop.f32.mrf.mxu0
  %v917 = vadd.f32 %v836, %v916
  %v918 = vpop.f32.mrf.mxu0
  %v919 = vpop.f32.mrf.mxu0
  %v920 = vadd.f32 %v836, %v919
  %v921 = vpop.f32.mrf.mxu0
  %922 = vmatprep.mubr.bf16.mxu0 0
  %923 = vmatmul.mubr.bf16.gmra.mxu0 %v874
  %v924 = vpop.f32.mrf.mxu0
  %v925 = vadd.f32 %v836, %v924
  %v926 = vpop.f32.mrf.mxu0
  %v927 = vpop.f32.mrf.mxu0
  %v928 = vadd.f32 %v836, %v927
  %v929 = vpop.f32.mrf.mxu0
  %930 = vmatprep.mubr.bf16.mxu0 0
  %931 = vmatmul.mubr.bf16.gmra.mxu0 %v877
  %v932 = vpop.f32.mrf.mxu0
  %v933 = vadd.f32 %v836, %v932
  %v934 = vpop.f32.mrf.mxu0
  %v935 = vpop.f32.mrf.mxu0
  %v936 = vadd.f32 %v836, %v935
  %v937 = vpop.f32.mrf.mxu0
  %938 = vmatprep.mubr.bf16.mxu0 0
  %939 = vmatmul.mubr.bf16.gmra.mxu0 %v880
  %v940 = vpop.f32.mrf.mxu0
  %v941 = vadd.f32 %v836, %v940
  %v942 = vpop.f32.mrf.mxu0
  %v943 = vpop.f32.mrf.mxu0
  %v944 = vadd.f32 %v836, %v943
  %v945 = vpop.f32.mrf.mxu0
  %946 = vdwg.mxu0
  %947 = vst [vmem:[#allocation2] sm:$0xff] %v917
  %948 = vst [vmem:[#allocation2 + $0x8] sm:$0xff] %v920
  %949 = vst [vmem:[#allocation2 + $0x10] sm:$0xff] %v925
  %950 = vst [vmem:[#allocation2 + $0x18] sm:$0xff] %v928
  %951 = vst [vmem:[#allocation2 + $0x20] sm:$0xff] %v933
  %952 = vst [vmem:[#allocation2 + $0x28] sm:$0xff] %v936
  %953 = vst [vmem:[#allocation2 + $0x30] sm:$0xff] %v941
  %954 = vst [vmem:[#allocation2 + $0x38] sm:$0xff] %v944
  %v955 = vld [vmem:[%s5] sm:$0xf]
  %v956 = vld [vmem:[%s5 + $0x4] sm:$0xf]
  %v957 = vld [vmem:[%s5 + $0x8] sm:$0xf]
  %v958 = vld [vmem:[%s5 + $0xc] sm:$0xf]
  %v959 = vld [vmem:[#allocation2] sm:$0xff]
  %v964 = vunpack.c.l.b16 %v955
  %v965 = vunpack.c.l.b16 %v956
  %v966 = vunpack.c.l.b16 %v957
  %v967 = vunpack.c.l.b16 %v958
  %v968 = vpack.c.b16 %v965, %v964
  %v969 = vpack.c.b16 %v967, %v966
  %972 = vmatprep.subr.bf16.mxu0 0
  %973 = vmatpush1.bf16.msra.mxu0 0
  %974 = vmatprep.subr.bf16.mxu0 0
  %975 = vmatpush1.bf16.msra.mxu0 0
  %976 = vmatprep.subr.bf16.mxu0 0
  %977 = vmatpush1.bf16.msra.mxu0 0
  %978 = vmatprep.subr.bf16.mxu0 0
  %979 = vmatpush1.bf16.msra.mxu0 0
  %980 = vmatprep.subr.bf16.mxu0 0
  %981 = vmatpush1.bf16.msra.mxu0 0
  %982 = vmatprep.subr.bf16.mxu0 0
  %983 = vmatpush1.bf16.msra.mxu0 0
  %984 = vmatprep.subr.bf16.mxu0 0
  %985 = vmatpush1.bf16.msra.mxu0 %v969
  %986 = vmatprep.subr.bf16.mxu0 0
  %987 = vmatpush1.bf16.msra.mxu0 %v968
  %988 = vmatprep.subr.bf16.mxu0 0
  %989 = vmatpush2.bf16.msra.mxu0 0
  %990 = vmatprep.subr.bf16.mxu0 0
  %991 = vmatpush2.bf16.msra.mxu0 0
  %992 = vmatprep.subr.bf16.mxu0 0
  %993 = vmatpush2.bf16.msra.mxu0 0
  %994 = vmatprep.subr.bf16.mxu0 0
  %995 = vmatpush2.bf16.msra.mxu0 0
  %996 = vmatprep.subr.bf16.mxu0 0
  %997 = vmatpush2.bf16.msra.mxu0 0
  %998 = vmatprep.subr.bf16.mxu0 0
  %999 = vmatpush2.bf16.msra.mxu0 0
  %1000 = vmatprep.subr.bf16.mxu0 0
  %1001 = vmatpush2.bf16.msra.mxu0 0
  %1002 = vmatprep.subr.bf16.mxu0 0
  %1003 = vmatpush2.bf16.msra.mxu0 0
  %1004 = vmatprep.mubr.bf16.mxu0 0
  %1005 = vmatmul.mubr.bf16.gmra.mxu0 %v168
  %v1006 = vpop.f32.mrf.mxu0
  %v1007 = vadd.f32 0.0, %v1006
  %v1008 = vpop.f32.mrf.mxu0
  %v1009 = vpop.f32.mrf.mxu0
  %v1010 = vpop.f32.mrf.mxu0
  %1011 = vdwg.mxu0
  %v1012 = vadd.f32 %v959, %v1007
  %v1013 = vxor.u32 %v1012, 2147483648
  %v1014 = vmul.f32 %v1013, 1.442695
  %v1015 = vpow.pop %v1014
  %v1016 = vadd.f32 %v1015, 1.0
  %v1017 = vrcp.pop %v1016
  %v1018 = vmul.f32 1.0, %v1017
  %v1019 = vtanh.pop %v1012
  %v1020 = vsel %vm35, %v1018, %v1019
  %v1021 = vmul.f32 %v1020, 0.0
  %1023 = vrot.lane.b32.xlu0 %v1020, 32
  %v1024 = vpop.permute.xlu0 %1023
  %v1026 = vmul.f32 %v1020, %v1024
  %1028 = vrot.lane.b32.xlu0 %v1026, 32
  %v1029 = vpop.permute.xlu0 %1028
  %v1031 = vadd.f32 %v1021, %v1029
  %v1032 = vtanh.pop %v1031
  %1034 = vrot.lane.b32.xlu0 %v1032, 32
  %v1035 = vpop.permute.xlu0 %1034
  %v1037 = vmul.f32 %v1020, %v1035
  %v1038 = vld [vmem:[%s245] sm:$0xff]
  %v1039 = vpack.c.bf16 %v1037, %v1037
  %1041 = vrot.lane.b32.xlu0 %v1039, 64
  %v1042 = vpop.permute.xlu0 %1041
  %v1044 = vsel %vm166, %v1042, 0
  %1046 = vmatprep.subr.bf16.mxu0 0
  %1047 = vmatpush1.bf16.msra.mxu0 0
  %1048 = vmatprep.subr.bf16.mxu0 0
  %1049 = vmatpush1.bf16.msra.mxu0 0
  %1050 = vmatprep.subr.bf16.mxu0 0
  %1051 = vmatpush1.bf16.msra.mxu0 0
  %1052 = vmatprep.subr.bf16.mxu0 0
  %1053 = vmatpush1.bf16.msra.mxu0 0
  %1054 = vmatprep.subr.bf16.mxu0 0
  %1055 = vmatpush1.bf16.msra.mxu0 0
  %1056 = vmatprep.subr.bf16.mxu0 0
  %1057 = vmatpush1.bf16.msra.mxu0 0
  %1058 = vmatprep.subr.bf16.mxu0 0
  %1059 = vmatpush1.bf16.msra.mxu0 %v969
  %1060 = vmatprep.subr.bf16.mxu0 0
  %1061 = vmatpush1.bf16.msra.mxu0 %v968
  %1062 = vmatprep.subr.bf16.mxu0 0
  %1063 = vmatpush2.bf16.msra.mxu0 0
  %1064 = vmatprep.subr.bf16.mxu0 0
  %1065 = vmatpush2.bf16.msra.mxu0 0
  %1066 = vmatprep.subr.bf16.mxu0 0
  %1067 = vmatpush2.bf16.msra.mxu0 0
  %1068 = vmatprep.subr.bf16.mxu0 0
  %1069 = vmatpush2.bf16.msra.mxu0 0
  %1070 = vmatprep.subr.bf16.mxu0 0
  %1071 = vmatpush2.bf16.msra.mxu0 0
  %1072 = vmatprep.subr.bf16.mxu0 0
  %1073 = vmatpush2.bf16.msra.mxu0 0
  %1074 = vmatprep.subr.bf16.mxu0 0
  %1075 = vmatpush2.bf16.msra.mxu0 0
  %1076 = vmatprep.subr.bf16.mxu0 0
  %1077 = vmatpush2.bf16.msra.mxu0 0
  %1078 = vmatprep.mubr.bf16.mxu0 0
  %1079 = vmatmul.mubr.bf16.gmra.mxu0 %v1044
  %v1080 = vpop.f32.mrf.mxu0
  %v1081 = vadd.f32 0.0, %v1080
  %v1082 = vpop.f32.mrf.mxu0
  %v1083 = vpop.f32.mrf.mxu0
  %v1084 = vpop.f32.mrf.mxu0
  %1085 = vdwg.mxu0
  %v1086 = vadd.f32 %v1038, %v1081
  %v1087 = vxor.u32 %v1086, 2147483648
  %v1088 = vmul.f32 %v1087, 1.442695
  %v1089 = vpow.pop %v1088
  %v1090 = vadd.f32 %v1089, 1.0
  %v1091 = vrcp.pop %v1090
  %v1092 = vmul.f32 1.0, %v1091
  %v1093 = vtanh.pop %v1086
  %v1094 = vsel %vm35, %v1092, %v1093
  %v1095 = vmul.f32 %v1094, %v1031
  %1097 = vrot.lane.b32.xlu0 %v1094, 32
  %v1098 = vpop.permute.xlu0 %1097
  %v1100 = vmul.f32 %v1094, %v1098
  %1102 = vrot.lane.b32.xlu0 %v1100, 32
  %v1103 = vpop.permute.xlu0 %1102
  %v1105 = vadd.f32 %v1095, %v1103
  %v1106 = vtanh.pop %v1105
  %1108 = vrot.lane.b32.xlu0 %v1106, 32
  %v1109 = vpop.permute.xlu0 %1108
  %v1111 = vmul.f32 %v1094, %v1109
  %v1112 = vld [vmem:[%s327] sm:$0xff]
  %v1113 = vpack.c.bf16 %v1111, %v1111
  %1115 = vrot.lane.b32.xlu0 %v1113, 64
  %v1116 = vpop.permute.xlu0 %1115
  %v1118 = vsel %vm166, %v1116, 0
  %1120 = vmatprep.subr.bf16.mxu0 0
  %1121 = vmatpush1.bf16.msra.mxu0 0
  %1122 = vmatprep.subr.bf16.mxu0 0
  %1123 = vmatpush1.bf16.msra.mxu0 0
  %1124 = vmatprep.subr.bf16.mxu0 0
  %1125 = vmatpush1.bf16.msra.mxu0 0
  %1126 = vmatprep.subr.bf16.mxu0 0
  %1127 = vmatpush1.bf16.msra.mxu0 0
  %1128 = vmatprep.subr.bf16.mxu0 0
  %1129 = vmatpush1.bf16.msra.mxu0 0
  %1130 = vmatprep.subr.bf16.mxu0 0
  %1131 = vmatpush1.bf16.msra.mxu0 0
  %1132 = vmatprep.subr.bf16.mxu0 0
  %1133 = vmatpush1.bf16.msra.mxu0 %v969
  %1134 = vmatprep.subr.bf16.mxu0 0
  %1135 = vmatpush1.bf16.msra.mxu0 %v968
  %1136 = vmatprep.subr.bf16.mxu0 0
  %1137 = vmatpush2.bf16.msra.mxu0 0
  %1138 = vmatprep.subr.bf16.mxu0 0
  %1139 = vmatpush2.bf16.msra.mxu0 0
  %1140 = vmatprep.subr.bf16.mxu0 0
  %1141 = vmatpush2.bf16.msra.mxu0 0
  %1142 = vmatprep.subr.bf16.mxu0 0
  %1143 = vmatpush2.bf16.msra.mxu0 0
  %1144 = vmatprep.subr.bf16.mxu0 0
  %1145 = vmatpush2.bf16.msra.mxu0 0
  %1146 = vmatprep.subr.bf16.mxu0 0
  %1147 = vmatpush2.bf16.msra.mxu0 0
  %1148 = vmatprep.subr.bf16.mxu0 0
  %1149 = vmatpush2.bf16.msra.mxu0 0
  %1150 = vmatprep.subr.bf16.mxu0 0
  %1151 = vmatpush2.bf16.msra.mxu0 0
  %1152 = vmatprep.mubr.bf16.mxu0 0
  %1153 = vmatmul.mubr.bf16.gmra.mxu0 %v1118
  %v1154 = vpop.f32.mrf.mxu0
  %v1155 = vadd.f32 0.0, %v1154
  %v1156 = vpop.f32.mrf.mxu0
  %v1157 = vpop.f32.mrf.mxu0
  %v1158 = vpop.f32.mrf.mxu0
  %1159 = vdwg.mxu0
  %v1160 = vadd.f32 %v1112, %v1155
  %v1161 = vxor.u32 %v1160, 2147483648
  %v1162 = vmul.f32 %v1161, 1.442695
  %v1163 = vpow.pop %v1162
  %v1164 = vadd.f32 %v1163, 1.0
  %v1165 = vrcp.pop %v1164
  %v1166 = vmul.f32 1.0, %v1165
  %v1167 = vtanh.pop %v1160
  %v1168 = vsel %vm35, %v1166, %v1167
  %v1169 = vmul.f32 %v1168, %v1105
  %1171 = vrot.lane.b32.xlu0 %v1168, 32
  %v1172 = vpop.permute.xlu0 %1171
  %v1174 = vmul.f32 %v1168, %v1172
  %1176 = vrot.lane.b32.xlu0 %v1174, 32
  %v1177 = vpop.permute.xlu0 %1176
  %v1179 = vadd.f32 %v1169, %v1177
  %v1180 = vtanh.pop %v1179
  %1182 = vrot.lane.b32.xlu0 %v1180, 32
  %v1183 = vpop.permute.xlu0 %1182
  %v1185 = vmul.f32 %v1168, %v1183
  %v1186 = vld [vmem:[%s409] sm:$0xff]
  %v1187 = vpack.c.bf16 %v1185, %v1185
  %1189 = vrot.lane.b32.xlu0 %v1187, 64
  %v1190 = vpop.permute.xlu0 %1189
  %v1192 = vsel %vm166, %v1190, 0
  %1194 = vmatprep.subr.bf16.mxu0 0
  %1195 = vmatpush1.bf16.msra.mxu0 0
  %1196 = vmatprep.subr.bf16.mxu0 0
  %1197 = vmatpush1.bf16.msra.mxu0 0
  %1198 = vmatprep.subr.bf16.mxu0 0
  %1199 = vmatpush1.bf16.msra.mxu0 0
  %1200 = vmatprep.subr.bf16.mxu0 0
  %1201 = vmatpush1.bf16.msra.mxu0 0
  %1202 = vmatprep.subr.bf16.mxu0 0
  %1203 = vmatpush1.bf16.msra.mxu0 0
  %1204 = vmatprep.subr.bf16.mxu0 0
  %1205 = vmatpush1.bf16.msra.mxu0 0
  %1206 = vmatprep.subr.bf16.mxu0 0
  %1207 = vmatpush1.bf16.msra.mxu0 %v969
  %1208 = vmatprep.subr.bf16.mxu0 0
  %1209 = vmatpush1.bf16.msra.mxu0 %v968
  %1210 = vmatprep.subr.bf16.mxu0 0
  %1211 = vmatpush2.bf16.msra.mxu0 0
  %1212 = vmatprep.subr.bf16.mxu0 0
  %1213 = vmatpush2.bf16.msra.mxu0 0
  %1214 = vmatprep.subr.bf16.mxu0 0
  %1215 = vmatpush2.bf16.msra.mxu0 0
  %1216 = vmatprep.subr.bf16.mxu0 0
  %1217 = vmatpush2.bf16.msra.mxu0 0
  %1218 = vmatprep.subr.bf16.mxu0 0
  %1219 = vmatpush2.bf16.msra.mxu0 0
  %1220 = vmatprep.subr.bf16.mxu0 0
  %1221 = vmatpush2.bf16.msra.mxu0 0
  %1222 = vmatprep.subr.bf16.mxu0 0
  %1223 = vmatpush2.bf16.msra.mxu0 0
  %1224 = vmatprep.subr.bf16.mxu0 0
  %1225 = vmatpush2.bf16.msra.mxu0 0
  %1226 = vmatprep.mubr.bf16.mxu0 0
  %1227 = vmatmul.mubr.bf16.gmra.mxu0 %v1192
  %v1228 = vpop.f32.mrf.mxu0
  %v1229 = vadd.f32 0.0, %v1228
  %v1230 = vpop.f32.mrf.mxu0
  %v1231 = vpop.f32.mrf.mxu0
  %v1232 = vpop.f32.mrf.mxu0
  %1233 = vdwg.mxu0
  %v1234 = vadd.f32 %v1186, %v1229
  %v1235 = vxor.u32 %v1234, 2147483648
  %v1236 = vmul.f32 %v1235, 1.442695
  %v1237 = vpow.pop %v1236
  %v1238 = vadd.f32 %v1237, 1.0
  %v1239 = vrcp.pop %v1238
  %v1240 = vmul.f32 1.0, %v1239
  %v1241 = vtanh.pop %v1234
  %v1242 = vsel %vm35, %v1240, %v1241
  %v1243 = vmul.f32 %v1242, %v1179
  %1245 = vrot.lane.b32.xlu0 %v1242, 32
  %v1246 = vpop.permute.xlu0 %1245
  %v1248 = vmul.f32 %v1242, %v1246
  %1250 = vrot.lane.b32.xlu0 %v1248, 32
  %v1251 = vpop.permute.xlu0 %1250
  %v1253 = vadd.f32 %v1243, %v1251
  %v1254 = vtanh.pop %v1253
  %1256 = vrot.lane.b32.xlu0 %v1254, 32
  %v1257 = vpop.permute.xlu0 %1256
  %v1259 = vmul.f32 %v1242, %v1257
  %v1260 = vld [vmem:[%s491] sm:$0xff]
  %v1261 = vpack.c.bf16 %v1259, %v1259
  %1263 = vrot.lane.b32.xlu0 %v1261, 64
  %v1264 = vpop.permute.xlu0 %1263
  %v1266 = vsel %vm166, %v1264, 0
  %1268 = vmatprep.subr.bf16.mxu0 0
  %1269 = vmatpush1.bf16.msra.mxu0 0
  %1270 = vmatprep.subr.bf16.mxu0 0
  %1271 = vmatpush1.bf16.msra.mxu0 0
  %1272 = vmatprep.subr.bf16.mxu0 0
  %1273 = vmatpush1.bf16.msra.mxu0 0
  %1274 = vmatprep.subr.bf16.mxu0 0
  %1275 = vmatpush1.bf16.msra.mxu0 0
  %1276 = vmatprep.subr.bf16.mxu0 0
  %1277 = vmatpush1.bf16.msra.mxu0 0
  %1278 = vmatprep.subr.bf16.mxu0 0
  %1279 = vmatpush1.bf16.msra.mxu0 0
  %1280 = vmatprep.subr.bf16.mxu0 0
  %1281 = vmatpush1.bf16.msra.mxu0 %v969
  %1282 = vmatprep.subr.bf16.mxu0 0
  %1283 = vmatpush1.bf16.msra.mxu0 %v968
  %1284 = vmatprep.subr.bf16.mxu0 0
  %1285 = vmatpush2.bf16.msra.mxu0 0
  %1286 = vmatprep.subr.bf16.mxu0 0
  %1287 = vmatpush2.bf16.msra.mxu0 0
  %1288 = vmatprep.subr.bf16.mxu0 0
  %1289 = vmatpush2.bf16.msra.mxu0 0
  %1290 = vmatprep.subr.bf16.mxu0 0
  %1291 = vmatpush2.bf16.msra.mxu0 0
  %1292 = vmatprep.subr.bf16.mxu0 0
  %1293 = vmatpush2.bf16.msra.mxu0 0
  %1294 = vmatprep.subr.bf16.mxu0 0
  %1295 = vmatpush2.bf16.msra.mxu0 0
  %1296 = vmatprep.subr.bf16.mxu0 0
  %1297 = vmatpush2.bf16.msra.mxu0 0
  %1298 = vmatprep.subr.bf16.mxu0 0
  %1299 = vmatpush2.bf16.msra.mxu0 0
  %1300 = vmatprep.mubr.bf16.mxu0 0
  %1301 = vmatmul.mubr.bf16.gmra.mxu0 %v1266
  %v1302 = vpop.f32.mrf.mxu0
  %v1303 = vadd.f32 0.0, %v1302
  %v1304 = vpop.f32.mrf.mxu0
  %v1305 = vpop.f32.mrf.mxu0
  %v1306 = vpop.f32.mrf.mxu0
  %1307 = vdwg.mxu0
  %v1308 = vadd.f32 %v1260, %v1303
  %v1309 = vxor.u32 %v1308, 2147483648
  %v1310 = vmul.f32 %v1309, 1.442695
  %v1311 = vpow.pop %v1310
  %v1312 = vadd.f32 %v1311, 1.0
  %v1313 = vrcp.pop %v1312
  %v1314 = vmul.f32 1.0, %v1313
  %v1315 = vtanh.pop %v1308
  %v1316 = vsel %vm35, %v1314, %v1315
  %v1317 = vmul.f32 %v1316, %v1253
  %1319 = vrot.lane.b32.xlu0 %v1316, 32
  %v1320 = vpop.permute.xlu0 %1319
  %v1322 = vmul.f32 %v1316, %v1320
  %1324 = vrot.lane.b32.xlu0 %v1322, 32
  %v1325 = vpop.permute.xlu0 %1324
  %v1327 = vadd.f32 %v1317, %v1325
  %v1328 = vtanh.pop %v1327
  %1330 = vrot.lane.b32.xlu0 %v1328, 32
  %v1331 = vpop.permute.xlu0 %1330
  %v1333 = vmul.f32 %v1316, %v1331
  %v1334 = vld [vmem:[%s573] sm:$0xff]
  %v1335 = vpack.c.bf16 %v1333, %v1333
  %1337 = vrot.lane.b32.xlu0 %v1335, 64
  %v1338 = vpop.permute.xlu0 %1337
  %v1340 = vsel %vm166, %v1338, 0
  %1342 = vmatprep.subr.bf16.mxu0 0
  %1343 = vmatpush1.bf16.msra.mxu0 0
  %1344 = vmatprep.subr.bf16.mxu0 0
  %1345 = vmatpush1.bf16.msra.mxu0 0
  %1346 = vmatprep.subr.bf16.mxu0 0
  %1347 = vmatpush1.bf16.msra.mxu0 0
  %1348 = vmatprep.subr.bf16.mxu0 0
  %1349 = vmatpush1.bf16.msra.mxu0 0
  %1350 = vmatprep.subr.bf16.mxu0 0
  %1351 = vmatpush1.bf16.msra.mxu0 0
  %1352 = vmatprep.subr.bf16.mxu0 0
  %1353 = vmatpush1.bf16.msra.mxu0 0
  %1354 = vmatprep.subr.bf16.mxu0 0
  %1355 = vmatpush1.bf16.msra.mxu0 %v969
  %1356 = vmatprep.subr.bf16.mxu0 0
  %1357 = vmatpush1.bf16.msra.mxu0 %v968
  %1358 = vmatprep.subr.bf16.mxu0 0
  %1359 = vmatpush2.bf16.msra.mxu0 0
  %1360 = vmatprep.subr.bf16.mxu0 0
  %1361 = vmatpush2.bf16.msra.mxu0 0
  %1362 = vmatprep.subr.bf16.mxu0 0
  %1363 = vmatpush2.bf16.msra.mxu0 0
  %1364 = vmatprep.subr.bf16.mxu0 0
  %1365 = vmatpush2.bf16.msra.mxu0 0
  %1366 = vmatprep.subr.bf16.mxu0 0
  %1367 = vmatpush2.bf16.msra.mxu0 0
  %1368 = vmatprep.subr.bf16.mxu0 0
  %1369 = vmatpush2.bf16.msra.mxu0 0
  %1370 = vmatprep.subr.bf16.mxu0 0
  %1371 = vmatpush2.bf16.msra.mxu0 0
  %1372 = vmatprep.subr.bf16.mxu0 0
  %1373 = vmatpush2.bf16.msra.mxu0 0
  %1374 = vmatprep.mubr.bf16.mxu0 0
  %1375 = vmatmul.mubr.bf16.gmra.mxu0 %v1340
  %v1376 = vpop.f32.mrf.mxu0
  %v1377 = vadd.f32 0.0, %v1376
  %v1378 = vpop.f32.mrf.mxu0
  %v1379 = vpop.f32.mrf.mxu0
  %v1380 = vpop.f32.mrf.mxu0
  %1381 = vdwg.mxu0
  %v1382 = vadd.f32 %v1334, %v1377
  %v1383 = vxor.u32 %v1382, 2147483648
  %v1384 = vmul.f32 %v1383, 1.442695
  %v1385 = vpow.pop %v1384
  %v1386 = vadd.f32 %v1385, 1.0
  %v1387 = vrcp.pop %v1386
  %v1388 = vmul.f32 1.0, %v1387
  %v1389 = vtanh.pop %v1382
  %v1390 = vsel %vm35, %v1388, %v1389
  %v1391 = vmul.f32 %v1390, %v1327
  %1393 = vrot.lane.b32.xlu0 %v1390, 32
  %v1394 = vpop.permute.xlu0 %1393
  %v1396 = vmul.f32 %v1390, %v1394
  %1398 = vrot.lane.b32.xlu0 %v1396, 32
  %v1399 = vpop.permute.xlu0 %1398
  %v1401 = vadd.f32 %v1391, %v1399
  %v1402 = vtanh.pop %v1401
  %1404 = vrot.lane.b32.xlu0 %v1402, 32
  %v1405 = vpop.permute.xlu0 %1404
  %v1407 = vmul.f32 %v1390, %v1405
  %v1408 = vld [vmem:[%s655] sm:$0xff]
  %v1409 = vpack.c.bf16 %v1407, %v1407
  %1411 = vrot.lane.b32.xlu0 %v1409, 64
  %v1412 = vpop.permute.xlu0 %1411
  %v1414 = vsel %vm166, %v1412, 0
  %1416 = vmatprep.subr.bf16.mxu0 0
  %1417 = vmatpush1.bf16.msra.mxu0 0
  %1418 = vmatprep.subr.bf16.mxu0 0
  %1419 = vmatpush1.bf16.msra.mxu0 0
  %1420 = vmatprep.subr.bf16.mxu0 0
  %1421 = vmatpush1.bf16.msra.mxu0 0
  %1422 = vmatprep.subr.bf16.mxu0 0
  %1423 = vmatpush1.bf16.msra.mxu0 0
  %1424 = vmatprep.subr.bf16.mxu0 0
  %1425 = vmatpush1.bf16.msra.mxu0 0
  %1426 = vmatprep.subr.bf16.mxu0 0
  %1427 = vmatpush1.bf16.msra.mxu0 0
  %1428 = vmatprep.subr.bf16.mxu0 0
  %1429 = vmatpush1.bf16.msra.mxu0 %v969
  %1430 = vmatprep.subr.bf16.mxu0 0
  %1431 = vmatpush1.bf16.msra.mxu0 %v968
  %1432 = vmatprep.subr.bf16.mxu0 0
  %1433 = vmatpush2.bf16.msra.mxu0 0
  %1434 = vmatprep.subr.bf16.mxu0 0
  %1435 = vmatpush2.bf16.msra.mxu0 0
  %1436 = vmatprep.subr.bf16.mxu0 0
  %1437 = vmatpush2.bf16.msra.mxu0 0
  %1438 = vmatprep.subr.bf16.mxu0 0
  %1439 = vmatpush2.bf16.msra.mxu0 0
  %1440 = vmatprep.subr.bf16.mxu0 0
  %1441 = vmatpush2.bf16.msra.mxu0 0
  %1442 = vmatprep.subr.bf16.mxu0 0
  %1443 = vmatpush2.bf16.msra.mxu0 0
  %1444 = vmatprep.subr.bf16.mxu0 0
  %1445 = vmatpush2.bf16.msra.mxu0 0
  %1446 = vmatprep.subr.bf16.mxu0 0
  %1447 = vmatpush2.bf16.msra.mxu0 0
  %1448 = vmatprep.mubr.bf16.mxu0 0
  %1449 = vmatmul.mubr.bf16.gmra.mxu0 %v1414
  %v1450 = vpop.f32.mrf.mxu0
  %v1451 = vadd.f32 0.0, %v1450
  %v1452 = vpop.f32.mrf.mxu0
  %v1453 = vpop.f32.mrf.mxu0
  %v1454 = vpop.f32.mrf.mxu0
  %1455 = vdwg.mxu0
  %v1456 = vadd.f32 %v1408, %v1451
  %v1457 = vxor.u32 %v1456, 2147483648
  %v1458 = vmul.f32 %v1457, 1.442695
  %v1459 = vpow.pop %v1458
  %v1460 = vadd.f32 %v1459, 1.0
  %v1461 = vrcp.pop %v1460
  %v1462 = vmul.f32 1.0, %v1461
  %v1463 = vtanh.pop %v1456
  %v1464 = vsel %vm35, %v1462, %v1463
  %v1465 = vmul.f32 %v1464, %v1401
  %1467 = vrot.lane.b32.xlu0 %v1464, 32
  %v1468 = vpop.permute.xlu0 %1467
  %v1470 = vmul.f32 %v1464, %v1468
  %1472 = vrot.lane.b32.xlu0 %v1470, 32
  %v1473 = vpop.permute.xlu0 %1472
  %v1475 = vadd.f32 %v1465, %v1473
  %v1476 = vtanh.pop %v1475
  %1478 = vrot.lane.b32.xlu0 %v1476, 32
  %v1479 = vpop.permute.xlu0 %1478
  %v1481 = vmul.f32 %v1464, %v1479
  %v1482 = vld [vmem:[%s737] sm:$0xff]
  %v1483 = vpack.c.bf16 %v1481, %v1481
  %1485 = vrot.lane.b32.xlu0 %v1483, 64
  %v1486 = vpop.permute.xlu0 %1485
  %v1488 = vsel %vm166, %v1486, 0
  %1490 = vmatprep.subr.bf16.mxu0 0
  %1491 = vmatpush1.bf16.msra.mxu0 0
  %1492 = vmatprep.subr.bf16.mxu0 0
  %1493 = vmatpush1.bf16.msra.mxu0 0
  %1494 = vmatprep.subr.bf16.mxu0 0
  %1495 = vmatpush1.bf16.msra.mxu0 0
  %1496 = vmatprep.subr.bf16.mxu0 0
  %1497 = vmatpush1.bf16.msra.mxu0 0
  %1498 = vmatprep.subr.bf16.mxu0 0
  %1499 = vmatpush1.bf16.msra.mxu0 0
  %1500 = vmatprep.subr.bf16.mxu0 0
  %1501 = vmatpush1.bf16.msra.mxu0 0
  %1502 = vmatprep.subr.bf16.mxu0 0
  %1503 = vmatpush1.bf16.msra.mxu0 %v969
  %1504 = vmatprep.subr.bf16.mxu0 0
  %1505 = vmatpush1.bf16.msra.mxu0 %v968
  %1506 = vmatprep.subr.bf16.mxu0 0
  %1507 = vmatpush2.bf16.msra.mxu0 0
  %1508 = vmatprep.subr.bf16.mxu0 0
  %1509 = vmatpush2.bf16.msra.mxu0 0
  %1510 = vmatprep.subr.bf16.mxu0 0
  %1511 = vmatpush2.bf16.msra.mxu0 0
  %1512 = vmatprep.subr.bf16.mxu0 0
  %1513 = vmatpush2.bf16.msra.mxu0 0
  %1514 = vmatprep.subr.bf16.mxu0 0
  %1515 = vmatpush2.bf16.msra.mxu0 0
  %1516 = vmatprep.subr.bf16.mxu0 0
  %1517 = vmatpush2.bf16.msra.mxu0 0
  %1518 = vmatprep.subr.bf16.mxu0 0
  %1519 = vmatpush2.bf16.msra.mxu0 0
  %1520 = vmatprep.subr.bf16.mxu0 0
  %1521 = vmatpush2.bf16.msra.mxu0 0
  %1522 = vmatprep.mubr.bf16.mxu0 0
  %1523 = vmatmul.mubr.bf16.gmra.mxu0 %v1488
  %v1524 = vpop.f32.mrf.mxu0
  %v1525 = vadd.f32 0.0, %v1524
  %v1526 = vpop.f32.mrf.mxu0
  %v1527 = vpop.f32.mrf.mxu0
  %v1528 = vpop.f32.mrf.mxu0
  %1529 = vdwg.mxu0
  %v1530 = vadd.f32 %v1482, %v1525
  %v1531 = vxor.u32 %v1530, 2147483648
  %v1532 = vmul.f32 %v1531, 1.442695
  %v1533 = vpow.pop %v1532
  %v1534 = vadd.f32 %v1533, 1.0
  %v1535 = vrcp.pop %v1534
  %v1536 = vmul.f32 1.0, %v1535
  %v1537 = vtanh.pop %v1530
  %v1538 = vsel %vm35, %v1536, %v1537
  %v1539 = vmul.f32 %v1538, %v1475
  %1541 = vrot.lane.b32.xlu0 %v1538, 32
  %v1542 = vpop.permute.xlu0 %1541
  %v1544 = vmul.f32 %v1538, %v1542
  %1546 = vrot.lane.b32.xlu0 %v1544, 32
  %v1547 = vpop.permute.xlu0 %1546
  %v1549 = vadd.f32 %v1539, %v1547
  %v1550 = vtanh.pop %v1549
  %1552 = vrot.lane.b32.xlu0 %v1550, 32
  %v1553 = vpop.permute.xlu0 %1552
  %v1555 = vmul.f32 %v1538, %v1553
  %v1556 = vpack.c.bf16 %v1555, %v1555
  %v1557 = vld [vmem:[%s7] sm:$0xf]
  %v1558 = vld [vmem:[%s7 + $0x4] sm:$0xf]
  %v1559 = vld [vmem:[%s7 + $0x8] sm:$0xf]
  %v1560 = vld [vmem:[%s7 + $0xc] sm:$0xf]
  %v1561 = vld [vmem:[%s8] sm:$0x1]
  %v1563 = vlaneseq
  %v1564 = vshrl.u32 %v1563, 7
  %v1565 = vsub.s32 0, %v1564
  %v1566 = vrot.slane %v1561, %v1565
  %1569 = vrot.lane.b32.xlu0 %v1556, 64
  %v1570 = vpop.permute.xlu0 %1569
  %v1575 = vunpack.c.l.b16 %v1557
  %v1576 = vunpack.c.l.b16 %v1558
  %v1577 = vunpack.c.l.b16 %v1559
  %v1578 = vunpack.c.l.b16 %v1560
  %v1579 = vpack.c.b16 %v1576, %v1575
  %v1580 = vpack.c.b16 %v1578, %v1577
  %v1584 = vsel %vm166, %v1570, 0
  %1586 = vmatprep.subr.bf16.mxu0 0
  %1587 = vmatpush1.bf16.msra.mxu0 0
  %1588 = vmatprep.subr.bf16.mxu0 0
  %1589 = vmatpush1.bf16.msra.mxu0 0
  %1590 = vmatprep.subr.bf16.mxu0 0
  %1591 = vmatpush1.bf16.msra.mxu0 0
  %1592 = vmatprep.subr.bf16.mxu0 0
  %1593 = vmatpush1.bf16.msra.mxu0 0
  %1594 = vmatprep.subr.bf16.mxu0 0
  %1595 = vmatpush1.bf16.msra.mxu0 0
  %1596 = vmatprep.subr.bf16.mxu0 0
  %1597 = vmatpush1.bf16.msra.mxu0 0
  %1598 = vmatprep.subr.bf16.mxu0 0
  %1599 = vmatpush1.bf16.msra.mxu0 %v1580
  %1600 = vmatprep.subr.bf16.mxu0 0
  %1601 = vmatpush1.bf16.msra.mxu0 %v1579
  %1602 = vmatprep.subr.bf16.mxu0 0
  %1603 = vmatpush2.bf16.msra.mxu0 0
  %1604 = vmatprep.subr.bf16.mxu0 0
  %1605 = vmatpush2.bf16.msra.mxu0 0
  %1606 = vmatprep.subr.bf16.mxu0 0
  %1607 = vmatpush2.bf16.msra.mxu0 0
  %1608 = vmatprep.subr.bf16.mxu0 0
  %1609 = vmatpush2.bf16.msra.mxu0 0
  %1610 = vmatprep.subr.bf16.mxu0 0
  %1611 = vmatpush2.bf16.msra.mxu0 0
  %1612 = vmatprep.subr.bf16.mxu0 0
  %1613 = vmatpush2.bf16.msra.mxu0 0
  %1614 = vmatprep.subr.bf16.mxu0 0
  %1615 = vmatpush2.bf16.msra.mxu0 0
  %1616 = vmatprep.subr.bf16.mxu0 0
  %1617 = vmatpush2.bf16.msra.mxu0 0
  %1618 = vmatprep.mubr.bf16.mxu0 0
  %1619 = vmatmul.mubr.bf16.gmra.mxu0 %v1584
  %v1620 = vpop.f32.mrf.mxu0
  %v1621 = vadd.f32 %v1566, %v1620
  %v1622 = vpop.f32.mrf.mxu0
  %v1623 = vpop.f32.mrf.mxu0
  %v1624 = vpop.f32.mrf.mxu0
  %1625 = vdwg.mxu0
  %1626 = vst [vmem:[%s9] sm:$0xff] %v1621
  // Predicated region
  $region38: #{lstm_model_forward.1} parent=0 // pred_check
    _
  $region39: #{lstm_model_forward.1} parent=0 // pred_check_branch
    %1628 = sbr.rel (0) target = $region41
  $region40: #{lstm_model_forward.1} parent=0 // pred_region
    _
  $region41: #{lstm_model_forward.1} parent=0 // pred_fallthru
    _
  // Predicated region
  $region42: #{lstm_model_forward.1} parent=0 // pred_check
    _
  $region43: #{lstm_model_forward.1} parent=0 // pred_check_branch
    %1630 = sbr.rel (0) target = $region45
  $region44: #{lstm_model_forward.1} parent=0 // pred_region
    _
  $region45: #{lstm_model_forward.1} parent=0 // pred_fallthru
    _

</llo_original>
